<compile_context>
chip_gen: v6e
topology: v6e:2x2x1
jax: 0.10.0
libtpu: 0.0.40
codegen_flags: <defaults>
</compile_context>

<pallas_src>
import functools

import jax
import jax.numpy as jnp
from jax import lax
from jax.experimental import pallas as pl
from jax.experimental.pallas import tpu as pltpu

MEL_N_CHANNELS = 32
HIDDEN_SIZE = 32
NUM_LAYERS = 2
EMBED_SIZE = 32
EPS = 1e-5

# Largest batch tile.  128 keeps gates/sig/tnh live ranges within the 64-vreg
# file on all generations (sweep 64/128/256 if the step body grows).
MAX_B_TILE = 128


def _round_up(x, m):
    return ((x + m - 1) // m) * m


def _choose_batch_tiling(batch):
    """Pick (padded_batch, batch_tile).

    Large tiles fill the MXU rows; when the batch allows, keep >=2 grid steps
    so the "parallel" grid axis shards across v7x's two TensorCores.
    """
    bp8 = _round_up(batch, 8)
    if bp8 <= MAX_B_TILE:
        if bp8 >= 16:  # split into >=2 parallel grid steps (v7x megacore)
            tile = max(8, ((bp8 // 2) // 8) * 8)
        else:
            tile = bp8
    else:
        tile = MAX_B_TILE
    bp = _round_up(bp8, tile)
    return bp, tile


def _eup_supports_bf16():
    """bf16 EUP/VPU path exists on v6e/v7x, not on v2-v5."""
    try:
        kind = jax.devices()[0].device_kind.lower()
    except Exception:
        return False
    if any(v in kind for v in ("v2", "v3", "v4", "v5")):
        return False
    return any(v in kind for v in ("v6", "v7"))


def make_kernel(num_layers, H, eps, eup_bf16):
    """Builds the Pallas kernel.

    Ref order:
      x_ref                          [T, Bt, D]  bf16 (time-major block)
      layer 0: w_ih0_T, w_hh0_T, b0  [D,4H] bf16, [H,4H] bf16, [1,4H] f32
      layer l>=1: w_cat_T, b_l       [2H,4H] bf16 (stacked [W_ih;W_hh]^T), [1,4H] f32
      w_lin_T, b_lin                 [H,E] bf16, [1,E] f32
      out_ref                        [Bt, E] f32
    """

    def kernel(*refs):
        x_ref = refs[0]
        wih0_ref, whh0_ref, b0_ref = refs[1], refs[2], refs[3]
        idx = 4
        wcat_refs, bcat_refs = [], []
        for _ in range(num_layers - 1):
            wcat_refs.append(refs[idx])
            bcat_refs.append(refs[idx + 1])
            idx += 2
        wlin_ref, blin_ref, out_ref = refs[idx], refs[idx + 1], refs[idx + 2]

        T, Bt, D = x_ref.shape
        f32, bf16 = jnp.float32, jnp.bfloat16
        eup_dt = bf16 if eup_bf16 else f32

        # ---- hoisted layer-0 input projection for all timesteps -------------
        # [T, Bt, D] -> [T*Bt, D] merges leading dims only (Bt % 8 == 0 -> free).
        x2d = x_ref[...].reshape(T * Bt, D)
        gates0 = jnp.dot(x2d, wih0_ref[...],
                         preferred_element_type=f32) + b0_ref[...]   # [T*Bt, 4H]

        whh0 = whh0_ref[...]
        wcat = [w[...] for w in wcat_refs]
        bcat = [b[...] for b in bcat_refs]

        # hidden_init=None in PyTorch -> zeros for every layer
        h = [jnp.zeros((Bt, H), f32) for _ in range(num_layers)]
        c = [jnp.zeros((Bt, H), f32) for _ in range(num_layers)]

        def lstm_cell(gates_f32, c_prev):
            # Full-vreg transcendentals (bf16 EUP path on v6e/v7x); combine
            # and the cell state stay in f32.
            g = gates_f32.astype(eup_dt)
            sig = jax.nn.sigmoid(g).astype(f32)
            tnh = jnp.tanh(g).astype(f32)
            i_g = sig[:, 0 * H:1 * H]
            f_g = sig[:, 1 * H:2 * H]
            g_g = tnh[:, 2 * H:3 * H]
            o_g = sig[:, 3 * H:4 * H]
            c_new = f_g * c_prev + i_g * g_g
            h_new = o_g * jnp.tanh(c_new)
            return h_new, c_new

        # ---- wavefront recurrence: layer l handles time (s - l) at step s ----
        # Within a step, layers are visited top-down so layer l reads h[l-1]
        # from the previous virtual step (i.e. layer l-1's output at the same
        # time index).  The per-step chains of different layers are independent
        # and overlap on MXU/EUP/VPU slots.
        for s in range(T + num_layers - 1):
            for l in range(num_layers - 1, -1, -1):
                t = s - l
                if t < 0 or t >= T:
                    continue
                if l == 0:
                    g_in = gates0[t * Bt:(t + 1) * Bt, :]      # aligned static slice
                    gates = g_in + jnp.dot(h[0].astype(bf16), whh0,
                                           preferred_element_type=f32)
                else:
                    xin = jnp.concatenate([h[l - 1], h[l]], axis=1).astype(bf16)
                    gates = jnp.dot(xin, wcat[l - 1],
                                    preferred_element_type=f32) + bcat[l - 1]
                h[l], c[l] = lstm_cell(gates, c[l])

        # ---- embeds = relu(Linear(hidden[-1])); L2 normalise -----------------
        embeds = jnp.maximum(
            jnp.dot(h[-1].astype(bf16), wlin_ref[...],
                    preferred_element_type=f32) + blin_ref[...],
            0.0)                                                # [Bt, E]
        norm = jnp.sqrt(jnp.sum(embeds * embeds, axis=1, keepdims=True))
        inv = pl.reciprocal(norm + eps, approx=True)            # EUP path
        # TODO(synk): E=32 -> masked lane stores in the epilogue; pad E to 128
        # lanes if the epilogue ever shows up in the bundle (low priority).
        out_ref[...] = (embeds * inv).astype(out_ref.dtype)

    return kernel


def init_params(key, D, H, E, num_layers):
    """Deterministic init mirroring _init_weight: xavier_normal matrices, zero biases."""
    params = {}
    keys = jax.random.split(key, 2 * num_layers + 1)

    def xavier(k, shape):
        fan_out, fan_in = shape
        std = (2.0 / (fan_in + fan_out)) ** 0.5
        return (std * jax.random.normal(k, shape)).astype(jnp.float32)

    for l in range(num_layers):
        din = D if l == 0 else H
        params[f"w_ih_{l}"] = xavier(keys[2 * l], (4 * H, din))
        params[f"w_hh_{l}"] = xavier(keys[2 * l + 1], (4 * H, H))
        params[f"b_ih_{l}"] = jnp.zeros((4 * H,), jnp.float32)
        params[f"b_hh_{l}"] = jnp.zeros((4 * H,), jnp.float32)
    params["w_lin"] = xavier(keys[-1], (E, H))
    params["b_lin"] = jnp.zeros((E,), jnp.float32)
    return params


@functools.partial(jax.jit, static_argnames=("num_layers", "eps", "eup_bf16"))
def _forward_impl(utterances, params, num_layers, eps, eup_bf16):
    B, T, D = utterances.shape
    H = params["w_hh_0"].shape[1]
    E = params["w_lin"].shape[0]

    Bp, b_tile = _choose_batch_tiling(B)

    x = utterances.astype(jnp.bfloat16)
    if Bp != B:
        x = jnp.pad(x, ((0, Bp - B), (0, 0), (0, 0)))
    # Time-major so the hoisted layer-0 gates land time-major (free per-step
    # slices); the HBM transpose is wrapper-side layout plumbing.
    x_tm = jnp.transpose(x, (1, 0, 2))                      # [T, Bp, D]

    inputs = [x_tm]
    in_specs = [pl.BlockSpec((T, b_tile, D), lambda i: (0, i, 0))]

    # Layer 0: separate W_ih (hoisted over T) and W_hh (in the recurrence).
    wih0_t = jnp.transpose(params["w_ih_0"]).astype(jnp.bfloat16)          # [D, 4H]
    whh0_t = jnp.transpose(params["w_hh_0"]).astype(jnp.bfloat16)          # [H, 4H]
    bias0 = (params["b_ih_0"] + params["b_hh_0"]).reshape(1, -1)           # [1, 4H]
    inputs += [wih0_t, whh0_t, bias0]
    in_specs += [pl.BlockSpec(wih0_t.shape, lambda i: (0, 0)),
                 pl.BlockSpec(whh0_t.shape, lambda i: (0, 0)),
                 pl.BlockSpec(bias0.shape, lambda i: (0, 0))]

    # Layers >= 1: fused [W_ih; W_hh] so one MXU push per step.
    for l in range(1, num_layers):
        wcat_t = jnp.transpose(
            jnp.concatenate([params[f"w_ih_{l}"], params[f"w_hh_{l}"]], axis=1)
        ).astype(jnp.bfloat16)                                             # [2H, 4H]
        bias = (params[f"b_ih_{l}"] + params[f"b_hh_{l}"]).reshape(1, -1)  # [1, 4H]
        inputs += [wcat_t, bias]
        in_specs += [pl.BlockSpec(wcat_t.shape, lambda i: (0, 0)),
                     pl.BlockSpec(bias.shape, lambda i: (0, 0))]

    wlin_t = jnp.transpose(params["w_lin"]).astype(jnp.bfloat16)           # [H, E]
    blin = params["b_lin"].reshape(1, -1)                                  # [1, E]
    inputs += [wlin_t, blin]
    in_specs += [pl.BlockSpec(wlin_t.shape, lambda i: (0, 0)),
                 pl.BlockSpec(blin.shape, lambda i: (0, 0))]

    # TODO(synk): for long sequences (T >> 100), add a trailing "arbitrary"
    # grid axis over time chunks with h/c carried in VMEM scratch and pl.when
    # init at chunk 0, so the resident hoisted-gates block stays a few MiB
    # (v7x has only 64 MiB VMEM) instead of scaling the unrolled loop.
    out = pl.pallas_call(
        make_kernel(num_layers, H, eps, eup_bf16),
        out_shape=jax.ShapeDtypeStruct((Bp, E), jnp.float32),
        grid=(Bp // b_tile,),
        in_specs=in_specs,
        out_specs=pl.BlockSpec((b_tile, E), lambda i: (i, 0)),
        compiler_params=pltpu.CompilerParams(dimension_semantics=("parallel",)),
    )(*inputs)
    return out[:B]


def speaker_encoder_forward(utterances, params, num_layers=NUM_LAYERS, eps=EPS):
    """utterances: [B, T, F] float32 -> L2-normed embeddings [B, E]."""
    return _forward_impl(utterances, params, num_layers=num_layers, eps=eps,
                         eup_bf16=_eup_supports_bf16())


def reference_forward(utterances, params, num_layers=NUM_LAYERS, eps=EPS):
    """Pure-JAX f32 reference matching PyTorch nn.LSTM + Linear + ReLU + norm."""
    B, T, D = utterances.shape
    x = jnp.transpose(utterances, (1, 0, 2))  # [T, B, D]
    h = None
    for l in range(num_layers):
        wih = params[f"w_ih_{l}"]
        whh = params[f"w_hh_{l}"]
        b = params[f"b_ih_{l}"] + params[f"b_hh_{l}"]
        H = whh.shape[1]

        def step(carry, x_t, wih=wih, whh=whh, b=b, H=H):
            h, c = carry
            gates = x_t @ wih.T + h @ whh.T + b
            i = jax.nn.sigmoid(gates[:, :H])
            f = jax.nn.sigmoid(gates[:, H:2 * H])
            g = jnp.tanh(gates[:, 2 * H:3 * H])
            o = jax.nn.sigmoid(gates[:, 3 * H:])
            c = f * c + i * g
            h = o * jnp.tanh(c)
            return (h, c), h

        (h, _), ys = lax.scan(step, (jnp.zeros((B, H)), jnp.zeros((B, H))), x)
        x = ys
    embeds = jax.nn.relu(h @ params["w_lin"].T + params["b_lin"])
    norm = jnp.linalg.norm(embeds, axis=1, keepdims=True)
    return embeds / (norm + eps)


if __name__ == "__main__":
    key = jax.random.PRNGKey(0)
    k_param, k_data = jax.random.split(key)

    B, T = 6, 8  # e.g. 3 speakers x 2 utterances, 8 frames
    params = init_params(k_param, MEL_N_CHANNELS, HIDDEN_SIZE, EMBED_SIZE, NUM_LAYERS)
    utterances = jax.random.normal(k_data, (B, T, MEL_N_CHANNELS), jnp.float32)

    out = speaker_encoder_forward(utterances, params)
    out = jax.block_until_ready(out)

    ref = reference_forward(utterances, params)
    assert out.shape == (B, EMBED_SIZE)
    # Tolerance covers bf16 MXU operands, the bf16 EUP path (on v6e/v7x) and
    # the approximate reciprocal, vs. the pure-f32 reference.
    assert jnp.allclose(out, ref, atol=3e-2, rtol=3e-2), "mismatch vs JAX reference"

    print("KERNEL_OK")
</pallas_src>

<mosaic_0001>
module attributes {stable_mosaic.version = 11 : i64} {
  func.func @kernel(%arg0: i32, %arg1: memref<8x8x32xbf16, #tpu.memory_space<vmem>>, %arg2: memref<32x128xbf16, #tpu.memory_space<vmem>>, %arg3: memref<32x128xbf16, #tpu.memory_space<vmem>>, %arg4: memref<1x128xf32, #tpu.memory_space<vmem>>, %arg5: memref<64x128xbf16, #tpu.memory_space<vmem>>, %arg6: memref<1x128xf32, #tpu.memory_space<vmem>>, %arg7: memref<32x32xbf16, #tpu.memory_space<vmem>>, %arg8: memref<1x32xf32, #tpu.memory_space<vmem>>, %arg9: memref<8x32xf32, #tpu.memory_space<vmem>>) attributes {dimension_semantics = [#tpu.dimension_semantics<parallel>], iteration_bounds = array<i64: 1>, scalar_prefetch = 0 : i64, scratch_operands = 0 : i64, tpu.core_type = #tpu.core_type<tc>, window_params = [{transform_indices = @transform_0, window_bounds = array<i64: 8, 8, 32>}, {pipeline_mode = #tpu.pipeline_mode<synchronous>, transform_indices = @transform_1, window_bounds = array<i64: 32, 128>}, {pipeline_mode = #tpu.pipeline_mode<synchronous>, transform_indices = @transform_2, window_bounds = array<i64: 32, 128>}, {pipeline_mode = #tpu.pipeline_mode<synchronous>, transform_indices = @transform_3, window_bounds = array<i64: 1, 128>}, {pipeline_mode = #tpu.pipeline_mode<synchronous>, transform_indices = @transform_4, window_bounds = array<i64: 64, 128>}, {pipeline_mode = #tpu.pipeline_mode<synchronous>, transform_indices = @transform_5, window_bounds = array<i64: 1, 128>}, {pipeline_mode = #tpu.pipeline_mode<synchronous>, transform_indices = @transform_6, window_bounds = array<i64: 32, 32>}, {pipeline_mode = #tpu.pipeline_mode<synchronous>, transform_indices = @transform_7, window_bounds = array<i64: 1, 32>}, {transform_indices = @transform_8, window_bounds = array<i64: 8, 32>}]} {
    %c0 = arith.constant 0 : index
    %c0_0 = arith.constant 0 : index
    %c0_1 = arith.constant 0 : index
    %0 = vector.load %arg1[%c0, %c0_0, %c0_1] : memref<8x8x32xbf16, #tpu.memory_space<vmem>>, vector<8x8x32xbf16>
    %1 = vector.shape_cast %0 : vector<8x8x32xbf16> to vector<64x32xbf16>
    %c0_2 = arith.constant 0 : index
    %c0_3 = arith.constant 0 : index
    %2 = vector.load %arg2[%c0_2, %c0_3] : memref<32x128xbf16, #tpu.memory_space<vmem>>, vector<32x128xbf16>
    %cst = arith.constant dense<0.000000e+00> : vector<64x128xf32>
    %3 = tpu.matmul %1, %2, %cst {dimension_numbers = #tpu.dot_dimension_numbers<[1], [0], [0], [1], [0, 0, 1, 1], [], []>} : vector<64x32xbf16>, vector<32x128xbf16>, vector<64x128xf32> -> vector<64x128xf32>
    %c0_4 = arith.constant 0 : index
    %c0_5 = arith.constant 0 : index
    %4 = vector.load %arg4[%c0_4, %c0_5] : memref<1x128xf32, #tpu.memory_space<vmem>>, vector<1x128xf32>
    %5 = vector.broadcast %4 : vector<1x128xf32> to vector<64x128xf32>
    %6 = arith.addf %3, %5 : vector<64x128xf32>
    %c0_6 = arith.constant 0 : index
    %c0_7 = arith.constant 0 : index
    %7 = vector.load %arg3[%c0_6, %c0_7] : memref<32x128xbf16, #tpu.memory_space<vmem>>, vector<32x128xbf16>
    %c0_8 = arith.constant 0 : index
    %c0_9 = arith.constant 0 : index
    %8 = vector.load %arg5[%c0_8, %c0_9] : memref<64x128xbf16, #tpu.memory_space<vmem>>, vector<64x128xbf16>
    %c0_10 = arith.constant 0 : index
    %c0_11 = arith.constant 0 : index
    %9 = vector.load %arg6[%c0_10, %c0_11] : memref<1x128xf32, #tpu.memory_space<vmem>>, vector<1x128xf32>
    %cst_12 = arith.constant 0.000000e+00 : f32
    %10 = vector.broadcast %cst_12 : f32 to vector<8x32xf32>
    %cst_13 = arith.constant 0.000000e+00 : f32
    %11 = vector.broadcast %cst_13 : f32 to vector<8x32xf32>
    %cst_14 = arith.constant 0.000000e+00 : f32
    %12 = vector.broadcast %cst_14 : f32 to vector<8x32xf32>
    %cst_15 = arith.constant 0.000000e+00 : f32
    %13 = vector.broadcast %cst_15 : f32 to vector<8x32xf32>
    %14 = vector.extract_strided_slice %6 {offsets = [0, 0], sizes = [8, 128], strides = [1, 1]} : vector<64x128xf32> to vector<8x128xf32>
    %15 = arith.truncf %10 : vector<8x32xf32> to vector<8x32xbf16>
    %cst_16 = arith.constant dense<0.000000e+00> : vector<8x128xf32>
    %16 = tpu.matmul %15, %7, %cst_16 {dimension_numbers = #tpu.dot_dimension_numbers<[1], [0], [0], [1], [0, 0, 1, 1], [], []>} : vector<8x32xbf16>, vector<32x128xbf16>, vector<8x128xf32> -> vector<8x128xf32>
    %17 = arith.addf %14, %16 : vector<8x128xf32>
    %18 = arith.negf %17 : vector<8x128xf32>
    %19 = math.exp %18 : vector<8x128xf32>
    %cst_17 = arith.constant 1.000000e+00 : f32
    %20 = vector.broadcast %cst_17 : f32 to vector<8x128xf32>
    %21 = arith.addf %20, %19 : vector<8x128xf32>
    %22 = arith.divf %20, %21 : vector<8x128xf32>
    %23 = math.tanh %17 : vector<8x128xf32>
    %24 = vector.extract_strided_slice %22 {offsets = [0, 0], sizes = [8, 32], strides = [1, 1]} : vector<8x128xf32> to vector<8x32xf32>
    %25 = vector.extract_strided_slice %22 {offsets = [0, 32], sizes = [8, 32], strides = [1, 1]} : vector<8x128xf32> to vector<8x32xf32>
    %26 = vector.extract_strided_slice %23 {offsets = [0, 64], sizes = [8, 32], strides = [1, 1]} : vector<8x128xf32> to vector<8x32xf32>
    %27 = vector.extract_strided_slice %22 {offsets = [0, 96], sizes = [8, 32], strides = [1, 1]} : vector<8x128xf32> to vector<8x32xf32>
    %28 = arith.mulf %25, %12 : vector<8x32xf32>
    %29 = arith.mulf %24, %26 : vector<8x32xf32>
    %30 = arith.addf %28, %29 : vector<8x32xf32>
    %31 = math.tanh %30 : vector<8x32xf32>
    %32 = arith.mulf %27, %31 : vector<8x32xf32>
    %33 = tpu.concatenate %32, %11 in 1 : vector<8x32xf32>, vector<8x32xf32> -> vector<8x64xf32>
    %34 = arith.truncf %33 : vector<8x64xf32> to vector<8x64xbf16>
    %cst_18 = arith.constant dense<0.000000e+00> : vector<8x128xf32>
    %35 = tpu.matmul %34, %8, %cst_18 {dimension_numbers = #tpu.dot_dimension_numbers<[1], [0], [0], [1], [0, 0, 1, 1], [], []>} : vector<8x64xbf16>, vector<64x128xbf16>, vector<8x128xf32> -> vector<8x128xf32>
    %36 = vector.broadcast %9 : vector<1x128xf32> to vector<8x128xf32>
    %37 = arith.addf %35, %36 : vector<8x128xf32>
    %38 = arith.negf %37 : vector<8x128xf32>
    %39 = math.exp %38 : vector<8x128xf32>
    %cst_19 = arith.constant 1.000000e+00 : f32
    %40 = vector.broadcast %cst_19 : f32 to vector<8x128xf32>
    %41 = arith.addf %40, %39 : vector<8x128xf32>
    %42 = arith.divf %40, %41 : vector<8x128xf32>
    %43 = math.tanh %37 : vector<8x128xf32>
    %44 = vector.extract_strided_slice %42 {offsets = [0, 0], sizes = [8, 32], strides = [1, 1]} : vector<8x128xf32> to vector<8x32xf32>
    %45 = vector.extract_strided_slice %42 {offsets = [0, 32], sizes = [8, 32], strides = [1, 1]} : vector<8x128xf32> to vector<8x32xf32>
    %46 = vector.extract_strided_slice %43 {offsets = [0, 64], sizes = [8, 32], strides = [1, 1]} : vector<8x128xf32> to vector<8x32xf32>
    %47 = vector.extract_strided_slice %42 {offsets = [0, 96], sizes = [8, 32], strides = [1, 1]} : vector<8x128xf32> to vector<8x32xf32>
    %48 = arith.mulf %45, %13 : vector<8x32xf32>
    %49 = arith.mulf %44, %46 : vector<8x32xf32>
    %50 = arith.addf %48, %49 : vector<8x32xf32>
    %51 = math.tanh %50 : vector<8x32xf32>
    %52 = arith.mulf %47, %51 : vector<8x32xf32>
    %53 = vector.extract_strided_slice %6 {offsets = [8, 0], sizes = [8, 128], strides = [1, 1]} : vector<64x128xf32> to vector<8x128xf32>
    %54 = arith.truncf %32 : vector<8x32xf32> to vector<8x32xbf16>
    %cst_20 = arith.constant dense<0.000000e+00> : vector<8x128xf32>
    %55 = tpu.matmul %54, %7, %cst_20 {dimension_numbers = #tpu.dot_dimension_numbers<[1], [0], [0], [1], [0, 0, 1, 1], [], []>} : vector<8x32xbf16>, vector<32x128xbf16>, vector<8x128xf32> -> vector<8x128xf32>
    %56 = arith.addf %53, %55 : vector<8x128xf32>
    %57 = arith.negf %56 : vector<8x128xf32>
    %58 = math.exp %57 : vector<8x128xf32>
    %cst_21 = arith.constant 1.000000e+00 : f32
    %59 = vector.broadcast %cst_21 : f32 to vector<8x128xf32>
    %60 = arith.addf %59, %58 : vector<8x128xf32>
    %61 = arith.divf %59, %60 : vector<8x128xf32>
    %62 = math.tanh %56 : vector<8x128xf32>
    %63 = vector.extract_strided_slice %61 {offsets = [0, 0], sizes = [8, 32], strides = [1, 1]} : vector<8x128xf32> to vector<8x32xf32>
    %64 = vector.extract_strided_slice %61 {offsets = [0, 32], sizes = [8, 32], strides = [1, 1]} : vector<8x128xf32> to vector<8x32xf32>
    %65 = vector.extract_strided_slice %62 {offsets = [0, 64], sizes = [8, 32], strides = [1, 1]} : vector<8x128xf32> to vector<8x32xf32>
    %66 = vector.extract_strided_slice %61 {offsets = [0, 96], sizes = [8, 32], strides = [1, 1]} : vector<8x128xf32> to vector<8x32xf32>
    %67 = arith.mulf %64, %30 : vector<8x32xf32>
    %68 = arith.mulf %63, %65 : vector<8x32xf32>
    %69 = arith.addf %67, %68 : vector<8x32xf32>
    %70 = math.tanh %69 : vector<8x32xf32>
    %71 = arith.mulf %66, %70 : vector<8x32xf32>
    %72 = tpu.concatenate %71, %52 in 1 : vector<8x32xf32>, vector<8x32xf32> -> vector<8x64xf32>
    %73 = arith.truncf %72 : vector<8x64xf32> to vector<8x64xbf16>
    %cst_22 = arith.constant dense<0.000000e+00> : vector<8x128xf32>
    %74 = tpu.matmul %73, %8, %cst_22 {dimension_numbers = #tpu.dot_dimension_numbers<[1], [0], [0], [1], [0, 0, 1, 1], [], []>} : vector<8x64xbf16>, vector<64x128xbf16>, vector<8x128xf32> -> vector<8x128xf32>
    %75 = vector.broadcast %9 : vector<1x128xf32> to vector<8x128xf32>
    %76 = arith.addf %74, %75 : vector<8x128xf32>
    %77 = arith.negf %76 : vector<8x128xf32>
    %78 = math.exp %77 : vector<8x128xf32>
    %cst_23 = arith.constant 1.000000e+00 : f32
    %79 = vector.broadcast %cst_23 : f32 to vector<8x128xf32>
    %80 = arith.addf %79, %78 : vector<8x128xf32>
    %81 = arith.divf %79, %80 : vector<8x128xf32>
    %82 = math.tanh %76 : vector<8x128xf32>
    %83 = vector.extract_strided_slice %81 {offsets = [0, 0], sizes = [8, 32], strides = [1, 1]} : vector<8x128xf32> to vector<8x32xf32>
    %84 = vector.extract_strided_slice %81 {offsets = [0, 32], sizes = [8, 32], strides = [1, 1]} : vector<8x128xf32> to vector<8x32xf32>
    %85 = vector.extract_strided_slice %82 {offsets = [0, 64], sizes = [8, 32], strides = [1, 1]} : vector<8x128xf32> to vector<8x32xf32>
    %86 = vector.extract_strided_slice %81 {offsets = [0, 96], sizes = [8, 32], strides = [1, 1]} : vector<8x128xf32> to vector<8x32xf32>
    %87 = arith.mulf %84, %50 : vector<8x32xf32>
    %88 = arith.mulf %83, %85 : vector<8x32xf32>
    %89 = arith.addf %87, %88 : vector<8x32xf32>
    %90 = math.tanh %89 : vector<8x32xf32>
    %91 = arith.mulf %86, %90 : vector<8x32xf32>
    %92 = vector.extract_strided_slice %6 {offsets = [16, 0], sizes = [8, 128], strides = [1, 1]} : vector<64x128xf32> to vector<8x128xf32>
    %93 = arith.truncf %71 : vector<8x32xf32> to vector<8x32xbf16>
    %cst_24 = arith.constant dense<0.000000e+00> : vector<8x128xf32>
    %94 = tpu.matmul %93, %7, %cst_24 {dimension_numbers = #tpu.dot_dimension_numbers<[1], [0], [0], [1], [0, 0, 1, 1], [], []>} : vector<8x32xbf16>, vector<32x128xbf16>, vector<8x128xf32> -> vector<8x128xf32>
    %95 = arith.addf %92, %94 : vector<8x128xf32>
    %96 = arith.negf %95 : vector<8x128xf32>
    %97 = math.exp %96 : vector<8x128xf32>
    %cst_25 = arith.constant 1.000000e+00 : f32
    %98 = vector.broadcast %cst_25 : f32 to vector<8x128xf32>
    %99 = arith.addf %98, %97 : vector<8x128xf32>
    %100 = arith.divf %98, %99 : vector<8x128xf32>
    %101 = math.tanh %95 : vector<8x128xf32>
    %102 = vector.extract_strided_slice %100 {offsets = [0, 0], sizes = [8, 32], strides = [1, 1]} : vector<8x128xf32> to vector<8x32xf32>
    %103 = vector.extract_strided_slice %100 {offsets = [0, 32], sizes = [8, 32], strides = [1, 1]} : vector<8x128xf32> to vector<8x32xf32>
    %104 = vector.extract_strided_slice %101 {offsets = [0, 64], sizes = [8, 32], strides = [1, 1]} : vector<8x128xf32> to vector<8x32xf32>
    %105 = vector.extract_strided_slice %100 {offsets = [0, 96], sizes = [8, 32], strides = [1, 1]} : vector<8x128xf32> to vector<8x32xf32>
    %106 = arith.mulf %103, %69 : vector<8x32xf32>
    %107 = arith.mulf %102, %104 : vector<8x32xf32>
    %108 = arith.addf %106, %107 : vector<8x32xf32>
    %109 = math.tanh %108 : vector<8x32xf32>
    %110 = arith.mulf %105, %109 : vector<8x32xf32>
    %111 = tpu.concatenate %110, %91 in 1 : vector<8x32xf32>, vector<8x32xf32> -> vector<8x64xf32>
    %112 = arith.truncf %111 : vector<8x64xf32> to vector<8x64xbf16>
    %cst_26 = arith.constant dense<0.000000e+00> : vector<8x128xf32>
    %113 = tpu.matmul %112, %8, %cst_26 {dimension_numbers = #tpu.dot_dimension_numbers<[1], [0], [0], [1], [0, 0, 1, 1], [], []>} : vector<8x64xbf16>, vector<64x128xbf16>, vector<8x128xf32> -> vector<8x128xf32>
    %114 = vector.broadcast %9 : vector<1x128xf32> to vector<8x128xf32>
    %115 = arith.addf %113, %114 : vector<8x128xf32>
    %116 = arith.negf %115 : vector<8x128xf32>
    %117 = math.exp %116 : vector<8x128xf32>
    %cst_27 = arith.constant 1.000000e+00 : f32
    %118 = vector.broadcast %cst_27 : f32 to vector<8x128xf32>
    %119 = arith.addf %118, %117 : vector<8x128xf32>
    %120 = arith.divf %118, %119 : vector<8x128xf32>
    %121 = math.tanh %115 : vector<8x128xf32>
    %122 = vector.extract_strided_slice %120 {offsets = [0, 0], sizes = [8, 32], strides = [1, 1]} : vector<8x128xf32> to vector<8x32xf32>
    %123 = vector.extract_strided_slice %120 {offsets = [0, 32], sizes = [8, 32], strides = [1, 1]} : vector<8x128xf32> to vector<8x32xf32>
    %124 = vector.extract_strided_slice %121 {offsets = [0, 64], sizes = [8, 32], strides = [1, 1]} : vector<8x128xf32> to vector<8x32xf32>
    %125 = vector.extract_strided_slice %120 {offsets = [0, 96], sizes = [8, 32], strides = [1, 1]} : vector<8x128xf32> to vector<8x32xf32>
    %126 = arith.mulf %123, %89 : vector<8x32xf32>
    %127 = arith.mulf %122, %124 : vector<8x32xf32>
    %128 = arith.addf %126, %127 : vector<8x32xf32>
    %129 = math.tanh %128 : vector<8x32xf32>
    %130 = arith.mulf %125, %129 : vector<8x32xf32>
    %131 = vector.extract_strided_slice %6 {offsets = [24, 0], sizes = [8, 128], strides = [1, 1]} : vector<64x128xf32> to vector<8x128xf32>
    %132 = arith.truncf %110 : vector<8x32xf32> to vector<8x32xbf16>
    %cst_28 = arith.constant dense<0.000000e+00> : vector<8x128xf32>
    %133 = tpu.matmul %132, %7, %cst_28 {dimension_numbers = #tpu.dot_dimension_numbers<[1], [0], [0], [1], [0, 0, 1, 1], [], []>} : vector<8x32xbf16>, vector<32x128xbf16>, vector<8x128xf32> -> vector<8x128xf32>
    %134 = arith.addf %131, %133 : vector<8x128xf32>
    %135 = arith.negf %134 : vector<8x128xf32>
    %136 = math.exp %135 : vector<8x128xf32>
    %cst_29 = arith.constant 1.000000e+00 : f32
    %137 = vector.broadcast %cst_29 : f32 to vector<8x128xf32>
    %138 = arith.addf %137, %136 : vector<8x128xf32>
    %139 = arith.divf %137, %138 : vector<8x128xf32>
    %140 = math.tanh %134 : vector<8x128xf32>
    %141 = vector.extract_strided_slice %139 {offsets = [0, 0], sizes = [8, 32], strides = [1, 1]} : vector<8x128xf32> to vector<8x32xf32>
    %142 = vector.extract_strided_slice %139 {offsets = [0, 32], sizes = [8, 32], strides = [1, 1]} : vector<8x128xf32> to vector<8x32xf32>
    %143 = vector.extract_strided_slice %140 {offsets = [0, 64], sizes = [8, 32], strides = [1, 1]} : vector<8x128xf32> to vector<8x32xf32>
    %144 = vector.extract_strided_slice %139 {offsets = [0, 96], sizes = [8, 32], strides = [1, 1]} : vector<8x128xf32> to vector<8x32xf32>
    %145 = arith.mulf %142, %108 : vector<8x32xf32>
    %146 = arith.mulf %141, %143 : vector<8x32xf32>
    %147 = arith.addf %145, %146 : vector<8x32xf32>
    %148 = math.tanh %147 : vector<8x32xf32>
    %149 = arith.mulf %144, %148 : vector<8x32xf32>
    %150 = tpu.concatenate %149, %130 in 1 : vector<8x32xf32>, vector<8x32xf32> -> vector<8x64xf32>
    %151 = arith.truncf %150 : vector<8x64xf32> to vector<8x64xbf16>
    %cst_30 = arith.constant dense<0.000000e+00> : vector<8x128xf32>
    %152 = tpu.matmul %151, %8, %cst_30 {dimension_numbers = #tpu.dot_dimension_numbers<[1], [0], [0], [1], [0, 0, 1, 1], [], []>} : vector<8x64xbf16>, vector<64x128xbf16>, vector<8x128xf32> -> vector<8x128xf32>
    %153 = vector.broadcast %9 : vector<1x128xf32> to vector<8x128xf32>
    %154 = arith.addf %152, %153 : vector<8x128xf32>
    %155 = arith.negf %154 : vector<8x128xf32>
    %156 = math.exp %155 : vector<8x128xf32>
    %cst_31 = arith.constant 1.000000e+00 : f32
    %157 = vector.broadcast %cst_31 : f32 to vector<8x128xf32>
    %158 = arith.addf %157, %156 : vector<8x128xf32>
    %159 = arith.divf %157, %158 : vector<8x128xf32>
    %160 = math.tanh %154 : vector<8x128xf32>
    %161 = vector.extract_strided_slice %159 {offsets = [0, 0], sizes = [8, 32], strides = [1, 1]} : vector<8x128xf32> to vector<8x32xf32>
    %162 = vector.extract_strided_slice %159 {offsets = [0, 32], sizes = [8, 32], strides = [1, 1]} : vector<8x128xf32> to vector<8x32xf32>
    %163 = vector.extract_strided_slice %160 {offsets = [0, 64], sizes = [8, 32], strides = [1, 1]} : vector<8x128xf32> to vector<8x32xf32>
    %164 = vector.extract_strided_slice %159 {offsets = [0, 96], sizes = [8, 32], strides = [1, 1]} : vector<8x128xf32> to vector<8x32xf32>
    %165 = arith.mulf %162, %128 : vector<8x32xf32>
    %166 = arith.mulf %161, %163 : vector<8x32xf32>
    %167 = arith.addf %165, %166 : vector<8x32xf32>
    %168 = math.tanh %167 : vector<8x32xf32>
    %169 = arith.mulf %164, %168 : vector<8x32xf32>
    %170 = vector.extract_strided_slice %6 {offsets = [32, 0], sizes = [8, 128], strides = [1, 1]} : vector<64x128xf32> to vector<8x128xf32>
    %171 = arith.truncf %149 : vector<8x32xf32> to vector<8x32xbf16>
    %cst_32 = arith.constant dense<0.000000e+00> : vector<8x128xf32>
    %172 = tpu.matmul %171, %7, %cst_32 {dimension_numbers = #tpu.dot_dimension_numbers<[1], [0], [0], [1], [0, 0, 1, 1], [], []>} : vector<8x32xbf16>, vector<32x128xbf16>, vector<8x128xf32> -> vector<8x128xf32>
    %173 = arith.addf %170, %172 : vector<8x128xf32>
    %174 = arith.negf %173 : vector<8x128xf32>
    %175 = math.exp %174 : vector<8x128xf32>
    %cst_33 = arith.constant 1.000000e+00 : f32
    %176 = vector.broadcast %cst_33 : f32 to vector<8x128xf32>
    %177 = arith.addf %176, %175 : vector<8x128xf32>
    %178 = arith.divf %176, %177 : vector<8x128xf32>
    %179 = math.tanh %173 : vector<8x128xf32>
    %180 = vector.extract_strided_slice %178 {offsets = [0, 0], sizes = [8, 32], strides = [1, 1]} : vector<8x128xf32> to vector<8x32xf32>
    %181 = vector.extract_strided_slice %178 {offsets = [0, 32], sizes = [8, 32], strides = [1, 1]} : vector<8x128xf32> to vector<8x32xf32>
    %182 = vector.extract_strided_slice %179 {offsets = [0, 64], sizes = [8, 32], strides = [1, 1]} : vector<8x128xf32> to vector<8x32xf32>
    %183 = vector.extract_strided_slice %178 {offsets = [0, 96], sizes = [8, 32], strides = [1, 1]} : vector<8x128xf32> to vector<8x32xf32>
    %184 = arith.mulf %181, %147 : vector<8x32xf32>
    %185 = arith.mulf %180, %182 : vector<8x32xf32>
    %186 = arith.addf %184, %185 : vector<8x32xf32>
    %187 = math.tanh %186 : vector<8x32xf32>
    %188 = arith.mulf %183, %187 : vector<8x32xf32>
    %189 = tpu.concatenate %188, %169 in 1 : vector<8x32xf32>, vector<8x32xf32> -> vector<8x64xf32>
    %190 = arith.truncf %189 : vector<8x64xf32> to vector<8x64xbf16>
    %cst_34 = arith.constant dense<0.000000e+00> : vector<8x128xf32>
    %191 = tpu.matmul %190, %8, %cst_34 {dimension_numbers = #tpu.dot_dimension_numbers<[1], [0], [0], [1], [0, 0, 1, 1], [], []>} : vector<8x64xbf16>, vector<64x128xbf16>, vector<8x128xf32> -> vector<8x128xf32>
    %192 = vector.broadcast %9 : vector<1x128xf32> to vector<8x128xf32>
    %193 = arith.addf %191, %192 : vector<8x128xf32>
    %194 = arith.negf %193 : vector<8x128xf32>
    %195 = math.exp %194 : vector<8x128xf32>
    %cst_35 = arith.constant 1.000000e+00 : f32
    %196 = vector.broadcast %cst_35 : f32 to vector<8x128xf32>
    %197 = arith.addf %196, %195 : vector<8x128xf32>
    %198 = arith.divf %196, %197 : vector<8x128xf32>
    %199 = math.tanh %193 : vector<8x128xf32>
    %200 = vector.extract_strided_slice %198 {offsets = [0, 0], sizes = [8, 32], strides = [1, 1]} : vector<8x128xf32> to vector<8x32xf32>
    %201 = vector.extract_strided_slice %198 {offsets = [0, 32], sizes = [8, 32], strides = [1, 1]} : vector<8x128xf32> to vector<8x32xf32>
    %202 = vector.extract_strided_slice %199 {offsets = [0, 64], sizes = [8, 32], strides = [1, 1]} : vector<8x128xf32> to vector<8x32xf32>
    %203 = vector.extract_strided_slice %198 {offsets = [0, 96], sizes = [8, 32], strides = [1, 1]} : vector<8x128xf32> to vector<8x32xf32>
    %204 = arith.mulf %201, %167 : vector<8x32xf32>
    %205 = arith.mulf %200, %202 : vector<8x32xf32>
    %206 = arith.addf %204, %205 : vector<8x32xf32>
    %207 = math.tanh %206 : vector<8x32xf32>
    %208 = arith.mulf %203, %207 : vector<8x32xf32>
    %209 = vector.extract_strided_slice %6 {offsets = [40, 0], sizes = [8, 128], strides = [1, 1]} : vector<64x128xf32> to vector<8x128xf32>
    %210 = arith.truncf %188 : vector<8x32xf32> to vector<8x32xbf16>
    %cst_36 = arith.constant dense<0.000000e+00> : vector<8x128xf32>
    %211 = tpu.matmul %210, %7, %cst_36 {dimension_numbers = #tpu.dot_dimension_numbers<[1], [0], [0], [1], [0, 0, 1, 1], [], []>} : vector<8x32xbf16>, vector<32x128xbf16>, vector<8x128xf32> -> vector<8x128xf32>
    %212 = arith.addf %209, %211 : vector<8x128xf32>
    %213 = arith.negf %212 : vector<8x128xf32>
    %214 = math.exp %213 : vector<8x128xf32>
    %cst_37 = arith.constant 1.000000e+00 : f32
    %215 = vector.broadcast %cst_37 : f32 to vector<8x128xf32>
    %216 = arith.addf %215, %214 : vector<8x128xf32>
    %217 = arith.divf %215, %216 : vector<8x128xf32>
    %218 = math.tanh %212 : vector<8x128xf32>
    %219 = vector.extract_strided_slice %217 {offsets = [0, 0], sizes = [8, 32], strides = [1, 1]} : vector<8x128xf32> to vector<8x32xf32>
    %220 = vector.extract_strided_slice %217 {offsets = [0, 32], sizes = [8, 32], strides = [1, 1]} : vector<8x128xf32> to vector<8x32xf32>
    %221 = vector.extract_strided_slice %218 {offsets = [0, 64], sizes = [8, 32], strides = [1, 1]} : vector<8x128xf32> to vector<8x32xf32>
    %222 = vector.extract_strided_slice %217 {offsets = [0, 96], sizes = [8, 32], strides = [1, 1]} : vector<8x128xf32> to vector<8x32xf32>
    %223 = arith.mulf %220, %186 : vector<8x32xf32>
    %224 = arith.mulf %219, %221 : vector<8x32xf32>
    %225 = arith.addf %223, %224 : vector<8x32xf32>
    %226 = math.tanh %225 : vector<8x32xf32>
    %227 = arith.mulf %222, %226 : vector<8x32xf32>
    %228 = tpu.concatenate %227, %208 in 1 : vector<8x32xf32>, vector<8x32xf32> -> vector<8x64xf32>
    %229 = arith.truncf %228 : vector<8x64xf32> to vector<8x64xbf16>
    %cst_38 = arith.constant dense<0.000000e+00> : vector<8x128xf32>
    %230 = tpu.matmul %229, %8, %cst_38 {dimension_numbers = #tpu.dot_dimension_numbers<[1], [0], [0], [1], [0, 0, 1, 1], [], []>} : vector<8x64xbf16>, vector<64x128xbf16>, vector<8x128xf32> -> vector<8x128xf32>
    %231 = vector.broadcast %9 : vector<1x128xf32> to vector<8x128xf32>
    %232 = arith.addf %230, %231 : vector<8x128xf32>
    %233 = arith.negf %232 : vector<8x128xf32>
    %234 = math.exp %233 : vector<8x128xf32>
    %cst_39 = arith.constant 1.000000e+00 : f32
    %235 = vector.broadcast %cst_39 : f32 to vector<8x128xf32>
    %236 = arith.addf %235, %234 : vector<8x128xf32>
    %237 = arith.divf %235, %236 : vector<8x128xf32>
    %238 = math.tanh %232 : vector<8x128xf32>
    %239 = vector.extract_strided_slice %237 {offsets = [0, 0], sizes = [8, 32], strides = [1, 1]} : vector<8x128xf32> to vector<8x32xf32>
    %240 = vector.extract_strided_slice %237 {offsets = [0, 32], sizes = [8, 32], strides = [1, 1]} : vector<8x128xf32> to vector<8x32xf32>
    %241 = vector.extract_strided_slice %238 {offsets = [0, 64], sizes = [8, 32], strides = [1, 1]} : vector<8x128xf32> to vector<8x32xf32>
    %242 = vector.extract_strided_slice %237 {offsets = [0, 96], sizes = [8, 32], strides = [1, 1]} : vector<8x128xf32> to vector<8x32xf32>
    %243 = arith.mulf %240, %206 : vector<8x32xf32>
    %244 = arith.mulf %239, %241 : vector<8x32xf32>
    %245 = arith.addf %243, %244 : vector<8x32xf32>
    %246 = math.tanh %245 : vector<8x32xf32>
    %247 = arith.mulf %242, %246 : vector<8x32xf32>
    %248 = vector.extract_strided_slice %6 {offsets = [48, 0], sizes = [8, 128], strides = [1, 1]} : vector<64x128xf32> to vector<8x128xf32>
    %249 = arith.truncf %227 : vector<8x32xf32> to vector<8x32xbf16>
    %cst_40 = arith.constant dense<0.000000e+00> : vector<8x128xf32>
    %250 = tpu.matmul %249, %7, %cst_40 {dimension_numbers = #tpu.dot_dimension_numbers<[1], [0], [0], [1], [0, 0, 1, 1], [], []>} : vector<8x32xbf16>, vector<32x128xbf16>, vector<8x128xf32> -> vector<8x128xf32>
    %251 = arith.addf %248, %250 : vector<8x128xf32>
    %252 = arith.negf %251 : vector<8x128xf32>
    %253 = math.exp %252 : vector<8x128xf32>
    %cst_41 = arith.constant 1.000000e+00 : f32
    %254 = vector.broadcast %cst_41 : f32 to vector<8x128xf32>
    %255 = arith.addf %254, %253 : vector<8x128xf32>
    %256 = arith.divf %254, %255 : vector<8x128xf32>
    %257 = math.tanh %251 : vector<8x128xf32>
    %258 = vector.extract_strided_slice %256 {offsets = [0, 0], sizes = [8, 32], strides = [1, 1]} : vector<8x128xf32> to vector<8x32xf32>
    %259 = vector.extract_strided_slice %256 {offsets = [0, 32], sizes = [8, 32], strides = [1, 1]} : vector<8x128xf32> to vector<8x32xf32>
    %260 = vector.extract_strided_slice %257 {offsets = [0, 64], sizes = [8, 32], strides = [1, 1]} : vector<8x128xf32> to vector<8x32xf32>
    %261 = vector.extract_strided_slice %256 {offsets = [0, 96], sizes = [8, 32], strides = [1, 1]} : vector<8x128xf32> to vector<8x32xf32>
    %262 = arith.mulf %259, %225 : vector<8x32xf32>
    %263 = arith.mulf %258, %260 : vector<8x32xf32>
    %264 = arith.addf %262, %263 : vector<8x32xf32>
    %265 = math.tanh %264 : vector<8x32xf32>
    %266 = arith.mulf %261, %265 : vector<8x32xf32>
    %267 = tpu.concatenate %266, %247 in 1 : vector<8x32xf32>, vector<8x32xf32> -> vector<8x64xf32>
    %268 = arith.truncf %267 : vector<8x64xf32> to vector<8x64xbf16>
    %cst_42 = arith.constant dense<0.000000e+00> : vector<8x128xf32>
    %269 = tpu.matmul %268, %8, %cst_42 {dimension_numbers = #tpu.dot_dimension_numbers<[1], [0], [0], [1], [0, 0, 1, 1], [], []>} : vector<8x64xbf16>, vector<64x128xbf16>, vector<8x128xf32> -> vector<8x128xf32>
    %270 = vector.broadcast %9 : vector<1x128xf32> to vector<8x128xf32>
    %271 = arith.addf %269, %270 : vector<8x128xf32>
    %272 = arith.negf %271 : vector<8x128xf32>
    %273 = math.exp %272 : vector<8x128xf32>
    %cst_43 = arith.constant 1.000000e+00 : f32
    %274 = vector.broadcast %cst_43 : f32 to vector<8x128xf32>
    %275 = arith.addf %274, %273 : vector<8x128xf32>
    %276 = arith.divf %274, %275 : vector<8x128xf32>
    %277 = math.tanh %271 : vector<8x128xf32>
    %278 = vector.extract_strided_slice %276 {offsets = [0, 0], sizes = [8, 32], strides = [1, 1]} : vector<8x128xf32> to vector<8x32xf32>
    %279 = vector.extract_strided_slice %276 {offsets = [0, 32], sizes = [8, 32], strides = [1, 1]} : vector<8x128xf32> to vector<8x32xf32>
    %280 = vector.extract_strided_slice %277 {offsets = [0, 64], sizes = [8, 32], strides = [1, 1]} : vector<8x128xf32> to vector<8x32xf32>
    %281 = vector.extract_strided_slice %276 {offsets = [0, 96], sizes = [8, 32], strides = [1, 1]} : vector<8x128xf32> to vector<8x32xf32>
    %282 = arith.mulf %279, %245 : vector<8x32xf32>
    %283 = arith.mulf %278, %280 : vector<8x32xf32>
    %284 = arith.addf %282, %283 : vector<8x32xf32>
    %285 = math.tanh %284 : vector<8x32xf32>
    %286 = arith.mulf %281, %285 : vector<8x32xf32>
    %287 = vector.extract_strided_slice %6 {offsets = [56, 0], sizes = [8, 128], strides = [1, 1]} : vector<64x128xf32> to vector<8x128xf32>
    %288 = arith.truncf %266 : vector<8x32xf32> to vector<8x32xbf16>
    %cst_44 = arith.constant dense<0.000000e+00> : vector<8x128xf32>
    %289 = tpu.matmul %288, %7, %cst_44 {dimension_numbers = #tpu.dot_dimension_numbers<[1], [0], [0], [1], [0, 0, 1, 1], [], []>} : vector<8x32xbf16>, vector<32x128xbf16>, vector<8x128xf32> -> vector<8x128xf32>
    %290 = arith.addf %287, %289 : vector<8x128xf32>
    %291 = arith.negf %290 : vector<8x128xf32>
    %292 = math.exp %291 : vector<8x128xf32>
    %cst_45 = arith.constant 1.000000e+00 : f32
    %293 = vector.broadcast %cst_45 : f32 to vector<8x128xf32>
    %294 = arith.addf %293, %292 : vector<8x128xf32>
    %295 = arith.divf %293, %294 : vector<8x128xf32>
    %296 = math.tanh %290 : vector<8x128xf32>
    %297 = vector.extract_strided_slice %295 {offsets = [0, 0], sizes = [8, 32], strides = [1, 1]} : vector<8x128xf32> to vector<8x32xf32>
    %298 = vector.extract_strided_slice %295 {offsets = [0, 32], sizes = [8, 32], strides = [1, 1]} : vector<8x128xf32> to vector<8x32xf32>
    %299 = vector.extract_strided_slice %296 {offsets = [0, 64], sizes = [8, 32], strides = [1, 1]} : vector<8x128xf32> to vector<8x32xf32>
    %300 = vector.extract_strided_slice %295 {offsets = [0, 96], sizes = [8, 32], strides = [1, 1]} : vector<8x128xf32> to vector<8x32xf32>
    %301 = arith.mulf %298, %264 : vector<8x32xf32>
    %302 = arith.mulf %297, %299 : vector<8x32xf32>
    %303 = arith.addf %301, %302 : vector<8x32xf32>
    %304 = math.tanh %303 : vector<8x32xf32>
    %305 = arith.mulf %300, %304 : vector<8x32xf32>
    %306 = tpu.concatenate %305, %286 in 1 : vector<8x32xf32>, vector<8x32xf32> -> vector<8x64xf32>
    %307 = arith.truncf %306 : vector<8x64xf32> to vector<8x64xbf16>
    %cst_46 = arith.constant dense<0.000000e+00> : vector<8x128xf32>
    %308 = tpu.matmul %307, %8, %cst_46 {dimension_numbers = #tpu.dot_dimension_numbers<[1], [0], [0], [1], [0, 0, 1, 1], [], []>} : vector<8x64xbf16>, vector<64x128xbf16>, vector<8x128xf32> -> vector<8x128xf32>
    %309 = vector.broadcast %9 : vector<1x128xf32> to vector<8x128xf32>
    %310 = arith.addf %308, %309 : vector<8x128xf32>
    %311 = arith.negf %310 : vector<8x128xf32>
    %312 = math.exp %311 : vector<8x128xf32>
    %cst_47 = arith.constant 1.000000e+00 : f32
    %313 = vector.broadcast %cst_47 : f32 to vector<8x128xf32>
    %314 = arith.addf %313, %312 : vector<8x128xf32>
    %315 = arith.divf %313, %314 : vector<8x128xf32>
    %316 = math.tanh %310 : vector<8x128xf32>
    %317 = vector.extract_strided_slice %315 {offsets = [0, 0], sizes = [8, 32], strides = [1, 1]} : vector<8x128xf32> to vector<8x32xf32>
    %318 = vector.extract_strided_slice %315 {offsets = [0, 32], sizes = [8, 32], strides = [1, 1]} : vector<8x128xf32> to vector<8x32xf32>
    %319 = vector.extract_strided_slice %316 {offsets = [0, 64], sizes = [8, 32], strides = [1, 1]} : vector<8x128xf32> to vector<8x32xf32>
    %320 = vector.extract_strided_slice %315 {offsets = [0, 96], sizes = [8, 32], strides = [1, 1]} : vector<8x128xf32> to vector<8x32xf32>
    %321 = arith.mulf %318, %284 : vector<8x32xf32>
    %322 = arith.mulf %317, %319 : vector<8x32xf32>
    %323 = arith.addf %321, %322 : vector<8x32xf32>
    %324 = math.tanh %323 : vector<8x32xf32>
    %325 = arith.mulf %320, %324 : vector<8x32xf32>
    %326 = arith.truncf %325 : vector<8x32xf32> to vector<8x32xbf16>
    %c0_48 = arith.constant 0 : index
    %c0_49 = arith.constant 0 : index
    %327 = vector.load %arg7[%c0_48, %c0_49] : memref<32x32xbf16, #tpu.memory_space<vmem>>, vector<32x32xbf16>
    %cst_50 = arith.constant dense<0.000000e+00> : vector<8x32xf32>
    %328 = tpu.matmul %326, %327, %cst_50 {dimension_numbers = #tpu.dot_dimension_numbers<[1], [0], [0], [1], [0, 0, 1, 1], [], []>} : vector<8x32xbf16>, vector<32x32xbf16>, vector<8x32xf32> -> vector<8x32xf32>
    %c0_51 = arith.constant 0 : index
    %c0_52 = arith.constant 0 : index
    %329 = vector.load %arg8[%c0_51, %c0_52] : memref<1x32xf32, #tpu.memory_space<vmem>>, vector<1x32xf32>
    %330 = vector.broadcast %329 : vector<1x32xf32> to vector<8x32xf32>
    %331 = arith.addf %328, %330 : vector<8x32xf32>
    %cst_53 = arith.constant 0.000000e+00 : f32
    %332 = vector.broadcast %cst_53 : f32 to vector<8x32xf32>
    %333 = arith.maximumf %331, %332 : vector<8x32xf32>
    %334 = arith.mulf %333, %333 : vector<8x32xf32>
    %cst_54 = arith.constant dense<0.000000e+00> : vector<8xf32>
    %335 = vector.multi_reduction <add>, %334, %cst_54 [1] : vector<8x32xf32> to vector<8xf32>
    %336 = vector.shape_cast %335 : vector<8xf32> to vector<8x1xf32>
    %337 = math.sqrt %336 : vector<8x1xf32>
    %cst_55 = arith.constant 9.99999974E-6 : f32
    %338 = vector.broadcast %cst_55 : f32 to vector<8x1xf32>
    %339 = arith.addf %337, %338 : vector<8x1xf32>
    %340 = tpu.reciprocal %339 {approx = true} : vector<8x1xf32> -> vector<8x1xf32>
    %341 = vector.broadcast %340 : vector<8x1xf32> to vector<8x32xf32>
    %342 = arith.mulf %333, %341 : vector<8x32xf32>
    %c0_56 = arith.constant 0 : index
    %c0_57 = arith.constant 0 : index
    %343 = vector.load %arg9[%c0_56, %c0_57] : memref<8x32xf32, #tpu.memory_space<vmem>>, vector<8x32xf32>
    tpu.vector_store %arg9[%c0_56, %c0_57], %342 {strides = array<i32>} : memref<8x32xf32, #tpu.memory_space<vmem>>, vector<8x32xf32>,
    return
  }
  func.func @transform_0(%arg0: i32) -> (i32, i32, i32) {
    %c0_i32 = arith.constant 0 : i32
    %c0_i32_0 = arith.constant 0 : i32
    %c0_i32_1 = arith.constant 0 : i32
    return %c0_i32, %arg0, %c0_i32_0 : i32, i32, i32
  }
  func.func @transform_1(%arg0: i32) -> (i32, i32) {
    %c0_i32 = arith.constant 0 : i32
    %c0_i32_0 = arith.constant 0 : i32
    %c0_i32_1 = arith.constant 0 : i32
    return %c0_i32, %c0_i32_0 : i32, i32
  }
  func.func @transform_2(%arg0: i32) -> (i32, i32) {
    %c0_i32 = arith.constant 0 : i32
    %c0_i32_0 = arith.constant 0 : i32
    %c0_i32_1 = arith.constant 0 : i32
    return %c0_i32, %c0_i32_0 : i32, i32
  }
  func.func @transform_3(%arg0: i32) -> (i32, i32) {
    %c0_i32 = arith.constant 0 : i32
    %c0_i32_0 = arith.constant 0 : i32
    %c0_i32_1 = arith.constant 0 : i32
    return %c0_i32, %c0_i32_0 : i32, i32
  }
  func.func @transform_4(%arg0: i32) -> (i32, i32) {
    %c0_i32 = arith.constant 0 : i32
    %c0_i32_0 = arith.constant 0 : i32
    %c0_i32_1 = arith.constant 0 : i32
    return %c0_i32, %c0_i32_0 : i32, i32
  }
  func.func @transform_5(%arg0: i32) -> (i32, i32) {
    %c0_i32 = arith.constant 0 : i32
    %c0_i32_0 = arith.constant 0 : i32
    %c0_i32_1 = arith.constant 0 : i32
    return %c0_i32, %c0_i32_0 : i32, i32
  }
  func.func @transform_6(%arg0: i32) -> (i32, i32) {
    %c0_i32 = arith.constant 0 : i32
    %c0_i32_0 = arith.constant 0 : i32
    %c0_i32_1 = arith.constant 0 : i32
    return %c0_i32, %c0_i32_0 : i32, i32
  }
  func.func @transform_7(%arg0: i32) -> (i32, i32) {
    %c0_i32 = arith.constant 0 : i32
    %c0_i32_0 = arith.constant 0 : i32
    %c0_i32_1 = arith.constant 0 : i32
    return %c0_i32, %c0_i32_0 : i32, i32
  }
  func.func @transform_8(%arg0: i32) -> (i32, i32) {
    %c0_i32 = arith.constant 0 : i32
    %c0_i32_0 = arith.constant 0 : i32
    return %arg0, %c0_i32 : i32, i32
  }
}

</mosaic_0001>

<llo_original>
// kernel: _forward_impl.1
$region0: #{_forward_impl.1}
  #allocation0 [shape = 'u32[]', space=smem, size = 0x4, offset = 0x4, fixed_abs, tag = 'smem constant byte address 0x4 - core index']
  #allocation1 [shape = 'u32[144,128]{1,0:T(1,128)}', space=vmem, size = 0x12000, scoped, tag = 'internal scratch']
  %s0 = inlined_call_operand.vmem [shape: bf16[8,8,32], index: 0, kind: input, shape index: {}]
  %s1 = inlined_call_operand.vmem [shape: bf16[32,128], index: 1, kind: input, shape index: {}]
  %s2 = inlined_call_operand.vmem [shape: bf16[32,128], index: 2, kind: input, shape index: {}]
  %s3 = inlined_call_operand.vmem [shape: f32[1,128], index: 3, kind: input, shape index: {}]
  %s4 = inlined_call_operand.vmem [shape: bf16[64,128], index: 4, kind: input, shape index: {}]
  %s5 = inlined_call_operand.vmem [shape: f32[1,128], index: 5, kind: input, shape index: {}]
  %s6 = inlined_call_operand.vmem [shape: bf16[32,32], index: 6, kind: input, shape index: {}]
  %s7 = inlined_call_operand.vmem [shape: f32[1,32], index: 7, kind: input, shape index: {}]
  %s8 = inlined_call_operand.hbm [shape: f32[8,32], index: 8, kind: output, shape index: {}]
  %s9 = sld [smem:[#allocation0]]
  $region42: #{_forward_impl.1} parent=0
    _
  %s11 = ssub.s32 1, %s9
  %s12 = scalar_select 0, %s11, %s9
  $region1: #{_forward_impl.1} parent=0
    #allocation2 [shape = 'u8[4096]{0}', space=vmem, size = 0x1000, scoped, tag = 'output window, operand 0, single buffered']
    #allocation3 [shape = 's32[1]{0}', space=sflag, size = 0x4, scoped, tag = 'scoped memory for _forward_impl.1']
    %13 = vsyncpa [#allocation3], 0
    // Predicated region
    $region2: #{_forward_impl.1} parent=1 // pred_check
      _
    $region3: #{_forward_impl.1} parent=1 // pred_check_branch
      %15 = sbr.rel (0) target = $region5
    $region4: #{_forward_impl.1} parent=1 // pred_region
      _
    $region5: #{_forward_impl.1} parent=1 // pred_fallthru
      _
    // Predicated region
    $region6: #{_forward_impl.1} parent=1 // pred_check
      _
    $region7: #{_forward_impl.1} parent=1 // pred_check_branch
      %17 = sbr.rel (0) target = $region9
    $region8: #{_forward_impl.1} parent=1 // pred_region
      _
    $region9: #{_forward_impl.1} parent=1 // pred_fallthru
      _
    // Predicated region
    $region10: #{_forward_impl.1} parent=1 // pred_check
      _
    $region11: #{_forward_impl.1} parent=1 // pred_check_branch
      %19 = sbr.rel (0) target = $region13
    $region12: #{_forward_impl.1} parent=1 // pred_region
      _
    $region13: #{_forward_impl.1} parent=1 // pred_fallthru
      _
    // Predicated region
    $region14: #{_forward_impl.1} parent=1 // pred_check
      _
    $region15: #{_forward_impl.1} parent=1 // pred_check_branch
      %21 = sbr.rel (0) target = $region17
    $region16: #{_forward_impl.1} parent=1 // pred_region
      _
    $region17: #{_forward_impl.1} parent=1 // pred_fallthru
      _
    // Predicated region
    $region18: #{_forward_impl.1} parent=1 // pred_check
      _
    $region19: #{_forward_impl.1} parent=1 // pred_check_branch
      %23 = sbr.rel (0) target = $region21
    $region20: #{_forward_impl.1} parent=1 // pred_region
      _
    $region21: #{_forward_impl.1} parent=1 // pred_fallthru
      _
    // Predicated region
    $region22: #{_forward_impl.1} parent=1 // pred_check
      _
    $region23: #{_forward_impl.1} parent=1 // pred_check_branch
      %25 = sbr.rel (0) target = $region25
    $region24: #{_forward_impl.1} parent=1 // pred_region
      _
    $region25: #{_forward_impl.1} parent=1 // pred_fallthru
      _
    // Predicated region
    $region26: #{_forward_impl.1} parent=1 // pred_check
      _
    $region27: #{_forward_impl.1} parent=1 // pred_check_branch
      %27 = sbr.rel (0) target = $region29
    $region28: #{_forward_impl.1} parent=1 // pred_region
      _
    $region29: #{_forward_impl.1} parent=1 // pred_fallthru
      _
    // Predicated region
    $region30: #{_forward_impl.1} parent=1 // pred_check
      _
    $region31: #{_forward_impl.1} parent=1 // pred_check_branch
      %29 = sbr.rel (0) target = $region33
    $region32: #{_forward_impl.1} parent=1 // pred_region
      _
    $region33: #{_forward_impl.1} parent=1 // pred_fallthru
      _
    %v31 = vld [vmem:[%s0] sm:$0xf]
    %v32 = vld [vmem:[%s0 + $0x4] sm:$0xf]
    %v33 = vld [vmem:[%s0 + $0x8] sm:$0xf]
    %v34 = vld [vmem:[%s0 + $0xc] sm:$0xf]
    %v35 = vld [vmem:[%s0 + $0x10] sm:$0xf]
    %v36 = vld [vmem:[%s0 + $0x14] sm:$0xf]
    %v37 = vld [vmem:[%s0 + $0x18] sm:$0xf]
    %v38 = vld [vmem:[%s0 + $0x1c] sm:$0xf]
    %v39 = vld [vmem:[%s1] sm:$0xf]
    %v40 = vld [vmem:[%s1 + $0x4] sm:$0xf]
    %v41 = vld [vmem:[%s1 + $0x8] sm:$0xf]
    %v42 = vld [vmem:[%s1 + $0xc] sm:$0xf]
    %v43 = vld [vmem:[%s3] sm:$0x1]
    %v45 = vlaneseq
    %v46 = vshrl.u32 %v45, 7
    %v47 = vsub.s32 0, %v46
    %v48 = vrot.slane %v43, %v47
    %v58 = vunpack.c.l.b16 %v31
    %v59 = vunpack.c.l.b16 %v32
    %v60 = vunpack.c.l.b16 %v33
    %v61 = vunpack.c.l.b16 %v34
    %v62 = vunpack.c.l.b16 %v35
    %v63 = vunpack.c.l.b16 %v36
    %v64 = vunpack.c.l.b16 %v37
    %v65 = vunpack.c.l.b16 %v38
    %v66 = vpack.c.b16 %v59, %v58
    %v67 = vpack.c.b16 %v61, %v60
    %v68 = vpack.c.b16 %v63, %v62
    %v69 = vpack.c.b16 %v65, %v64
    %v74 = vunpack.c.l.b16 %v39
    %v75 = vunpack.c.l.b16 %v40
    %v76 = vunpack.c.l.b16 %v41
    %v77 = vunpack.c.l.b16 %v42
    %v78 = vpack.c.b16 %v75, %v74
    %v79 = vpack.c.b16 %v77, %v76
    %vm82 = vcmask 261120
    %v84 = vsel %vm82, %v66, 0
    %v87 = vsel %vm82, %v67, 0
    %v90 = vsel %vm82, %v68, 0
    %v93 = vsel %vm82, %v69, 0
    %95 = vmatprep.subr.bf16.mxu0 0
    %96 = vmatpush1.bf16.msra.mxu0 0
    %97 = vmatprep.subr.bf16.mxu0 0
    %98 = vmatpush1.bf16.msra.mxu0 0
    %99 = vmatprep.subr.bf16.mxu0 0
    %100 = vmatpush1.bf16.msra.mxu0 0
    %101 = vmatprep.subr.bf16.mxu0 0
    %102 = vmatpush1.bf16.msra.mxu0 0
    %103 = vmatprep.subr.bf16.mxu0 0
    %104 = vmatpush1.bf16.msra.mxu0 0
    %105 = vmatprep.subr.bf16.mxu0 0
    %106 = vmatpush1.bf16.msra.mxu0 0
    %107 = vmatprep.subr.bf16.mxu0 0
    %108 = vmatpush1.bf16.msra.mxu0 %v79
    %109 = vmatprep.subr.bf16.mxu0 0
    %110 = vmatpush1.bf16.msra.mxu0 %v78
    %111 = vmatprep.subr.bf16.mxu0 0
    %112 = vmatpush2.bf16.msra.mxu0 0
    %113 = vmatprep.subr.bf16.mxu0 0
    %114 = vmatpush2.bf16.msra.mxu0 0
    %115 = vmatprep.subr.bf16.mxu0 0
    %116 = vmatpush2.bf16.msra.mxu0 0
    %117 = vmatprep.subr.bf16.mxu0 0
    %118 = vmatpush2.bf16.msra.mxu0 0
    %119 = vmatprep.subr.bf16.mxu0 0
    %120 = vmatpush2.bf16.msra.mxu0 0
    %121 = vmatprep.subr.bf16.mxu0 0
    %122 = vmatpush2.bf16.msra.mxu0 0
    %123 = vmatprep.subr.bf16.mxu0 0
    %124 = vmatpush2.bf16.msra.mxu0 0
    %125 = vmatprep.subr.bf16.mxu0 0
    %126 = vmatpush2.bf16.msra.mxu0 0
    %127 = vmatprep.mubr.bf16.mxu0 0
    %128 = vmatmul.mubr.bf16.gmra.mxu0 %v84
    %v129 = vpop.f32.mrf.mxu0
    %v130 = vadd.f32 %v48, %v129
    %v131 = vpop.f32.mrf.mxu0
    %v132 = vpop.f32.mrf.mxu0
    %v133 = vadd.f32 %v48, %v132
    %v134 = vpop.f32.mrf.mxu0
    %135 = vmatprep.mubr.bf16.mxu0 0
    %136 = vmatmul.mubr.bf16.gmra.mxu0 %v87
    %v137 = vpop.f32.mrf.mxu0
    %v138 = vadd.f32 %v48, %v137
    %v139 = vpop.f32.mrf.mxu0
    %v140 = vpop.f32.mrf.mxu0
    %v141 = vadd.f32 %v48, %v140
    %v142 = vpop.f32.mrf.mxu0
    %143 = vmatprep.mubr.bf16.mxu0 0
    %144 = vmatmul.mubr.bf16.gmra.mxu0 %v90
    %v145 = vpop.f32.mrf.mxu0
    %v146 = vadd.f32 %v48, %v145
    %v147 = vpop.f32.mrf.mxu0
    %v148 = vpop.f32.mrf.mxu0
    %v149 = vadd.f32 %v48, %v148
    %v150 = vpop.f32.mrf.mxu0
    %151 = vmatprep.mubr.bf16.mxu0 0
    %152 = vmatmul.mubr.bf16.gmra.mxu0 %v93
    %v153 = vpop.f32.mrf.mxu0
    %v154 = vadd.f32 %v48, %v153
    %v155 = vpop.f32.mrf.mxu0
    %v156 = vpop.f32.mrf.mxu0
    %v157 = vadd.f32 %v48, %v156
    %v158 = vpop.f32.mrf.mxu0
    %159 = vdwg.mxu0
    %v160 = vld [vmem:[%s2] sm:$0xf]
    %v161 = vld [vmem:[%s2 + $0x4] sm:$0xf]
    %v162 = vld [vmem:[%s2 + $0x8] sm:$0xf]
    %v163 = vld [vmem:[%s2 + $0xc] sm:$0xf]
    %v164 = vld [vmem:[%s4] sm:$0xf]
    %v165 = vld [vmem:[%s4 + $0x4] sm:$0xf]
    %v166 = vld [vmem:[%s4 + $0x8] sm:$0xf]
    %v167 = vld [vmem:[%s4 + $0xc] sm:$0xf]
    %v168 = vld [vmem:[%s4 + $0x10] sm:$0xf]
    %v169 = vld [vmem:[%s4 + $0x14] sm:$0xf]
    %v170 = vld [vmem:[%s4 + $0x18] sm:$0xf]
    %v171 = vld [vmem:[%s4 + $0x1c] sm:$0xf]
    %v172 = vld [vmem:[%s5] sm:$0x1]
    %v177 = vunpack.c.l.b16 %v160
    %v178 = vunpack.c.l.b16 %v161
    %v179 = vunpack.c.l.b16 %v162
    %v180 = vunpack.c.l.b16 %v163
    %v181 = vpack.c.b16 %v178, %v177
    %v182 = vpack.c.b16 %v180, %v179
    %v186 = vsel %vm82, 0, 0
    %188 = vmatprep.subr.bf16.mxu0 0
    %189 = vmatpush1.bf16.msra.mxu0 0
    %190 = vmatprep.subr.bf16.mxu0 0
    %191 = vmatpush1.bf16.msra.mxu0 0
    %192 = vmatprep.subr.bf16.mxu0 0
    %193 = vmatpush1.bf16.msra.mxu0 0
    %194 = vmatprep.subr.bf16.mxu0 0
    %195 = vmatpush1.bf16.msra.mxu0 0
    %196 = vmatprep.subr.bf16.mxu0 0
    %197 = vmatpush1.bf16.msra.mxu0 0
    %198 = vmatprep.subr.bf16.mxu0 0
    %199 = vmatpush1.bf16.msra.mxu0 0
    %200 = vmatprep.subr.bf16.mxu0 0
    %201 = vmatpush1.bf16.msra.mxu0 %v182
    %202 = vmatprep.subr.bf16.mxu0 0
    %203 = vmatpush1.bf16.msra.mxu0 %v181
    %204 = vmatprep.subr.bf16.mxu0 0
    %205 = vmatpush2.bf16.msra.mxu0 0
    %206 = vmatprep.subr.bf16.mxu0 0
    %207 = vmatpush2.bf16.msra.mxu0 0
    %208 = vmatprep.subr.bf16.mxu0 0
    %209 = vmatpush2.bf16.msra.mxu0 0
    %210 = vmatprep.subr.bf16.mxu0 0
    %211 = vmatpush2.bf16.msra.mxu0 0
    %212 = vmatprep.subr.bf16.mxu0 0
    %213 = vmatpush2.bf16.msra.mxu0 0
    %214 = vmatprep.subr.bf16.mxu0 0
    %215 = vmatpush2.bf16.msra.mxu0 0
    %216 = vmatprep.subr.bf16.mxu0 0
    %217 = vmatpush2.bf16.msra.mxu0 0
    %218 = vmatprep.subr.bf16.mxu0 0
    %219 = vmatpush2.bf16.msra.mxu0 0
    %220 = vmatprep.mubr.bf16.mxu0 0
    %221 = vmatmul.mubr.bf16.gmra.mxu0 %v186
    %v222 = vpop.f32.mrf.mxu0
    %v223 = vadd.f32 0.0, %v222
    %v224 = vpop.f32.mrf.mxu0
    %v225 = vpop.f32.mrf.mxu0
    %v226 = vpop.f32.mrf.mxu0
    %227 = vdwg.mxu0
    %v228 = vadd.f32 %v130, %v223
    %v229 = vxor.u32 %v228, 2147483648
    %v230 = vmul.f32 %v229, 1.442695
    %v231 = vpow.pop %v230
    %v232 = vadd.f32 %v231, 1.0
    %v233 = vrcp.pop %v232
    %v234 = vmul.f32 1.0, %v233
    %v235 = vtanh.pop %v228
    %v236 = vmul.f32 %v234, 0.0
    %238 = vrot.lane.b32.xlu0 %v235, 64
    %v239 = vpop.permute.xlu0 %238
    %v241 = vmul.f32 %v234, %v239
    %243 = vrot.lane.b32.xlu0 %v241, 32
    %v244 = vpop.permute.xlu0 %243
    %v246 = vadd.f32 %v236, %v244
    %v247 = vtanh.pop %v246
    %249 = vrot.lane.b32.xlu0 %v247, 64
    %v250 = vpop.permute.xlu0 %249
    %v252 = vmul.f32 %v234, %v250
    %254 = vrot.lane.b32.xlu0 %v252, 32
    %v255 = vpop.permute.xlu0 %254
    %v257 = vsel %vm82, %v255, 0.0
    %v258 = vpack.c.bf16 %v257, %v257
    %v260 = vlaneseq
    %v261 = vshrl.u32 %v260, 7
    %v262 = vsub.s32 0, %v261
    %v263 = vrot.slane %v172, %v262
    %v273 = vunpack.c.l.b16 %v164
    %v274 = vunpack.c.l.b16 %v165
    %v275 = vunpack.c.l.b16 %v166
    %v276 = vunpack.c.l.b16 %v167
    %v277 = vunpack.c.l.b16 %v168
    %v278 = vunpack.c.l.b16 %v169
    %v279 = vunpack.c.l.b16 %v170
    %v280 = vunpack.c.l.b16 %v171
    %v281 = vpack.c.b16 %v274, %v273
    %v282 = vpack.c.b16 %v276, %v275
    %v283 = vpack.c.b16 %v278, %v277
    %v284 = vpack.c.b16 %v280, %v279
    %vm289 = vcmask 523264
    %v291 = vsel %vm289, %v258, 0
    %293 = vmatprep.subr.bf16.mxu0 0
    %294 = vmatpush1.bf16.msra.mxu0 0
    %295 = vmatprep.subr.bf16.mxu0 0
    %296 = vmatpush1.bf16.msra.mxu0 0
    %297 = vmatprep.subr.bf16.mxu0 0
    %298 = vmatpush1.bf16.msra.mxu0 0
    %299 = vmatprep.subr.bf16.mxu0 0
    %300 = vmatpush1.bf16.msra.mxu0 0
    %301 = vmatprep.subr.bf16.mxu0 0
    %302 = vmatpush1.bf16.msra.mxu0 %v284
    %303 = vmatprep.subr.bf16.mxu0 0
    %304 = vmatpush1.bf16.msra.mxu0 %v283
    %305 = vmatprep.subr.bf16.mxu0 0
    %306 = vmatpush1.bf16.msra.mxu0 %v282
    %307 = vmatprep.subr.bf16.mxu0 0
    %308 = vmatpush1.bf16.msra.mxu0 %v281
    %309 = vmatprep.subr.bf16.mxu0 0
    %310 = vmatpush2.bf16.msra.mxu0 0
    %311 = vmatprep.subr.bf16.mxu0 0
    %312 = vmatpush2.bf16.msra.mxu0 0
    %313 = vmatprep.subr.bf16.mxu0 0
    %314 = vmatpush2.bf16.msra.mxu0 0
    %315 = vmatprep.subr.bf16.mxu0 0
    %316 = vmatpush2.bf16.msra.mxu0 0
    %317 = vmatprep.subr.bf16.mxu0 0
    %318 = vmatpush2.bf16.msra.mxu0 0
    %319 = vmatprep.subr.bf16.mxu0 0
    %320 = vmatpush2.bf16.msra.mxu0 0
    %321 = vmatprep.subr.bf16.mxu0 0
    %322 = vmatpush2.bf16.msra.mxu0 0
    %323 = vmatprep.subr.bf16.mxu0 0
    %324 = vmatpush2.bf16.msra.mxu0 0
    %325 = vmatprep.mubr.bf16.mxu0 0
    %326 = vmatmul.mubr.bf16.gmra.mxu0 %v291
    %v327 = vpop.f32.mrf.mxu0
    %v328 = vadd.f32 %v263, %v327
    %v329 = vpop.f32.mrf.mxu0
    %v330 = vpop.f32.mrf.mxu0
    %v331 = vpop.f32.mrf.mxu0
    %332 = vdwg.mxu0
    %v333 = vxor.u32 %v328, 2147483648
    %v334 = vmul.f32 %v333, 1.442695
    %v335 = vpow.pop %v334
    %v336 = vadd.f32 %v335, 1.0
    %v337 = vrcp.pop %v336
    %v338 = vmul.f32 1.0, %v337
    %v339 = vtanh.pop %v328
    %v340 = vmul.f32 %v338, 0.0
    %342 = vrot.lane.b32.xlu0 %v339, 64
    %v343 = vpop.permute.xlu0 %342
    %v345 = vmul.f32 %v338, %v343
    %347 = vrot.lane.b32.xlu0 %v345, 32
    %v348 = vpop.permute.xlu0 %347
    %v350 = vadd.f32 %v340, %v348
    %v351 = vtanh.pop %v350
    %353 = vrot.lane.b32.xlu0 %v351, 64
    %v354 = vpop.permute.xlu0 %353
    %v356 = vmul.f32 %v338, %v354
    %v357 = vpack.c.bf16 %v252, %v252
    %359 = vrot.lane.b32.xlu0 %v357, 32
    %v360 = vpop.permute.xlu0 %359
    %v362 = vsel %vm82, %v360, 0
    %364 = vmatprep.subr.bf16.mxu0 0
    %365 = vmatpush1.bf16.msra.mxu0 0
    %366 = vmatprep.subr.bf16.mxu0 0
    %367 = vmatpush1.bf16.msra.mxu0 0
    %368 = vmatprep.subr.bf16.mxu0 0
    %369 = vmatpush1.bf16.msra.mxu0 0
    %370 = vmatprep.subr.bf16.mxu0 0
    %371 = vmatpush1.bf16.msra.mxu0 0
    %372 = vmatprep.subr.bf16.mxu0 0
    %373 = vmatpush1.bf16.msra.mxu0 0
    %374 = vmatprep.subr.bf16.mxu0 0
    %375 = vmatpush1.bf16.msra.mxu0 0
    %376 = vmatprep.subr.bf16.mxu0 0
    %377 = vmatpush1.bf16.msra.mxu0 %v182
    %378 = vmatprep.subr.bf16.mxu0 0
    %379 = vmatpush1.bf16.msra.mxu0 %v181
    %380 = vmatprep.subr.bf16.mxu0 0
    %381 = vmatpush2.bf16.msra.mxu0 0
    %382 = vmatprep.subr.bf16.mxu0 0
    %383 = vmatpush2.bf16.msra.mxu0 0
    %384 = vmatprep.subr.bf16.mxu0 0
    %385 = vmatpush2.bf16.msra.mxu0 0
    %386 = vmatprep.subr.bf16.mxu0 0
    %387 = vmatpush2.bf16.msra.mxu0 0
    %388 = vmatprep.subr.bf16.mxu0 0
    %389 = vmatpush2.bf16.msra.mxu0 0
    %390 = vmatprep.subr.bf16.mxu0 0
    %391 = vmatpush2.bf16.msra.mxu0 0
    %392 = vmatprep.subr.bf16.mxu0 0
    %393 = vmatpush2.bf16.msra.mxu0 0
    %394 = vmatprep.subr.bf16.mxu0 0
    %395 = vmatpush2.bf16.msra.mxu0 0
    %396 = vmatprep.mubr.bf16.mxu0 0
    %397 = vmatmul.mubr.bf16.gmra.mxu0 %v362
    %v398 = vpop.f32.mrf.mxu0
    %v399 = vadd.f32 0.0, %v398
    %v400 = vpop.f32.mrf.mxu0
    %v401 = vpop.f32.mrf.mxu0
    %v402 = vpop.f32.mrf.mxu0
    %403 = vdwg.mxu0
    %v404 = vadd.f32 %v133, %v399
    %v405 = vxor.u32 %v404, 2147483648
    %v406 = vmul.f32 %v405, 1.442695
    %v407 = vpow.pop %v406
    %v408 = vadd.f32 %v407, 1.0
    %v409 = vrcp.pop %v408
    %v410 = vmul.f32 1.0, %v409
    %v411 = vtanh.pop %v404
    %v412 = vmul.f32 %v410, %v246
    %414 = vrot.lane.b32.xlu0 %v411, 64
    %v415 = vpop.permute.xlu0 %414
    %v417 = vmul.f32 %v410, %v415
    %419 = vrot.lane.b32.xlu0 %v417, 32
    %v420 = vpop.permute.xlu0 %419
    %v422 = vadd.f32 %v412, %v420
    %v423 = vtanh.pop %v422
    %425 = vrot.lane.b32.xlu0 %v423, 64
    %v426 = vpop.permute.xlu0 %425
    %v428 = vmul.f32 %v410, %v426
    %430 = vrot.lane.b32.xlu0 %v428, 32
    %v431 = vpop.permute.xlu0 %430
    %434 = vrot.lane.b32.xlu0 %v356, 64
    %v435 = vpop.permute.xlu0 %434
    %v437 = vsel %vm82, %v431, %v435
    %v438 = vpack.c.bf16 %v437, %v437
    %v440 = vsel %vm289, %v438, 0
    %442 = vmatprep.subr.bf16.mxu0 0
    %443 = vmatpush1.bf16.msra.mxu0 0
    %444 = vmatprep.subr.bf16.mxu0 0
    %445 = vmatpush1.bf16.msra.mxu0 0
    %446 = vmatprep.subr.bf16.mxu0 0
    %447 = vmatpush1.bf16.msra.mxu0 0
    %448 = vmatprep.subr.bf16.mxu0 0
    %449 = vmatpush1.bf16.msra.mxu0 0
    %450 = vmatprep.subr.bf16.mxu0 0
    %451 = vmatpush1.bf16.msra.mxu0 %v284
    %452 = vmatprep.subr.bf16.mxu0 0
    %453 = vmatpush1.bf16.msra.mxu0 %v283
    %454 = vmatprep.subr.bf16.mxu0 0
    %455 = vmatpush1.bf16.msra.mxu0 %v282
    %456 = vmatprep.subr.bf16.mxu0 0
    %457 = vmatpush1.bf16.msra.mxu0 %v281
    %458 = vmatprep.subr.bf16.mxu0 0
    %459 = vmatpush2.bf16.msra.mxu0 0
    %460 = vmatprep.subr.bf16.mxu0 0
    %461 = vmatpush2.bf16.msra.mxu0 0
    %462 = vmatprep.subr.bf16.mxu0 0
    %463 = vmatpush2.bf16.msra.mxu0 0
    %464 = vmatprep.subr.bf16.mxu0 0
    %465 = vmatpush2.bf16.msra.mxu0 0
    %466 = vmatprep.subr.bf16.mxu0 0
    %467 = vmatpush2.bf16.msra.mxu0 0
    %468 = vmatprep.subr.bf16.mxu0 0
    %469 = vmatpush2.bf16.msra.mxu0 0
    %470 = vmatprep.subr.bf16.mxu0 0
    %471 = vmatpush2.bf16.msra.mxu0 0
    %472 = vmatprep.subr.bf16.mxu0 0
    %473 = vmatpush2.bf16.msra.mxu0 0
    %474 = vmatprep.mubr.bf16.mxu0 0
    %475 = vmatmul.mubr.bf16.gmra.mxu0 %v440
    %v476 = vpop.f32.mrf.mxu0
    %v477 = vadd.f32 %v263, %v476
    %v478 = vpop.f32.mrf.mxu0
    %v479 = vpop.f32.mrf.mxu0
    %v480 = vpop.f32.mrf.mxu0
    %481 = vdwg.mxu0
    %v482 = vxor.u32 %v477, 2147483648
    %v483 = vmul.f32 %v482, 1.442695
    %v484 = vpow.pop %v483
    %v485 = vadd.f32 %v484, 1.0
    %v486 = vrcp.pop %v485
    %v487 = vmul.f32 1.0, %v486
    %v488 = vtanh.pop %v477
    %v489 = vmul.f32 %v487, %v350
    %491 = vrot.lane.b32.xlu0 %v488, 64
    %v492 = vpop.permute.xlu0 %491
    %v494 = vmul.f32 %v487, %v492
    %496 = vrot.lane.b32.xlu0 %v494, 32
    %v497 = vpop.permute.xlu0 %496
    %v499 = vadd.f32 %v489, %v497
    %v500 = vtanh.pop %v499
    %502 = vrot.lane.b32.xlu0 %v500, 64
    %v503 = vpop.permute.xlu0 %502
    %v505 = vmul.f32 %v487, %v503
    %v506 = vpack.c.bf16 %v428, %v428
    %508 = vrot.lane.b32.xlu0 %v506, 32
    %v509 = vpop.permute.xlu0 %508
    %v511 = vsel %vm82, %v509, 0
    %513 = vmatprep.subr.bf16.mxu0 0
    %514 = vmatpush1.bf16.msra.mxu0 0
    %515 = vmatprep.subr.bf16.mxu0 0
    %516 = vmatpush1.bf16.msra.mxu0 0
    %517 = vmatprep.subr.bf16.mxu0 0
    %518 = vmatpush1.bf16.msra.mxu0 0
    %519 = vmatprep.subr.bf16.mxu0 0
    %520 = vmatpush1.bf16.msra.mxu0 0
    %521 = vmatprep.subr.bf16.mxu0 0
    %522 = vmatpush1.bf16.msra.mxu0 0
    %523 = vmatprep.subr.bf16.mxu0 0
    %524 = vmatpush1.bf16.msra.mxu0 0
    %525 = vmatprep.subr.bf16.mxu0 0
    %526 = vmatpush1.bf16.msra.mxu0 %v182
    %527 = vmatprep.subr.bf16.mxu0 0
    %528 = vmatpush1.bf16.msra.mxu0 %v181
    %529 = vmatprep.subr.bf16.mxu0 0
    %530 = vmatpush2.bf16.msra.mxu0 0
    %531 = vmatprep.subr.bf16.mxu0 0
    %532 = vmatpush2.bf16.msra.mxu0 0
    %533 = vmatprep.subr.bf16.mxu0 0
    %534 = vmatpush2.bf16.msra.mxu0 0
    %535 = vmatprep.subr.bf16.mxu0 0
    %536 = vmatpush2.bf16.msra.mxu0 0
    %537 = vmatprep.subr.bf16.mxu0 0
    %538 = vmatpush2.bf16.msra.mxu0 0
    %539 = vmatprep.subr.bf16.mxu0 0
    %540 = vmatpush2.bf16.msra.mxu0 0
    %541 = vmatprep.subr.bf16.mxu0 0
    %542 = vmatpush2.bf16.msra.mxu0 0
    %543 = vmatprep.subr.bf16.mxu0 0
    %544 = vmatpush2.bf16.msra.mxu0 0
    %545 = vmatprep.mubr.bf16.mxu0 0
    %546 = vmatmul.mubr.bf16.gmra.mxu0 %v511
    %v547 = vpop.f32.mrf.mxu0
    %v548 = vadd.f32 0.0, %v547
    %v549 = vpop.f32.mrf.mxu0
    %v550 = vpop.f32.mrf.mxu0
    %v551 = vpop.f32.mrf.mxu0
    %552 = vdwg.mxu0
    %v553 = vadd.f32 %v138, %v548
    %v554 = vxor.u32 %v553, 2147483648
    %v555 = vmul.f32 %v554, 1.442695
    %v556 = vpow.pop %v555
    %v557 = vadd.f32 %v556, 1.0
    %v558 = vrcp.pop %v557
    %v559 = vmul.f32 1.0, %v558
    %v560 = vtanh.pop %v553
    %v561 = vmul.f32 %v559, %v422
    %563 = vrot.lane.b32.xlu0 %v560, 64
    %v564 = vpop.permute.xlu0 %563
    %v566 = vmul.f32 %v559, %v564
    %568 = vrot.lane.b32.xlu0 %v566, 32
    %v569 = vpop.permute.xlu0 %568
    %v571 = vadd.f32 %v561, %v569
    %v572 = vtanh.pop %v571
    %574 = vrot.lane.b32.xlu0 %v572, 64
    %v575 = vpop.permute.xlu0 %574
    %v577 = vmul.f32 %v559, %v575
    %579 = vrot.lane.b32.xlu0 %v577, 32
    %v580 = vpop.permute.xlu0 %579
    %583 = vrot.lane.b32.xlu0 %v505, 64
    %v584 = vpop.permute.xlu0 %583
    %v586 = vsel %vm82, %v580, %v584
    %v587 = vpack.c.bf16 %v586, %v586
    %v589 = vsel %vm289, %v587, 0
    %591 = vmatprep.subr.bf16.mxu0 0
    %592 = vmatpush1.bf16.msra.mxu0 0
    %593 = vmatprep.subr.bf16.mxu0 0
    %594 = vmatpush1.bf16.msra.mxu0 0
    %595 = vmatprep.subr.bf16.mxu0 0
    %596 = vmatpush1.bf16.msra.mxu0 0
    %597 = vmatprep.subr.bf16.mxu0 0
    %598 = vmatpush1.bf16.msra.mxu0 0
    %599 = vmatprep.subr.bf16.mxu0 0
    %600 = vmatpush1.bf16.msra.mxu0 %v284
    %601 = vmatprep.subr.bf16.mxu0 0
    %602 = vmatpush1.bf16.msra.mxu0 %v283
    %603 = vmatprep.subr.bf16.mxu0 0
    %604 = vmatpush1.bf16.msra.mxu0 %v282
    %605 = vmatprep.subr.bf16.mxu0 0
    %606 = vmatpush1.bf16.msra.mxu0 %v281
    %607 = vmatprep.subr.bf16.mxu0 0
    %608 = vmatpush2.bf16.msra.mxu0 0
    %609 = vmatprep.subr.bf16.mxu0 0
    %610 = vmatpush2.bf16.msra.mxu0 0
    %611 = vmatprep.subr.bf16.mxu0 0
    %612 = vmatpush2.bf16.msra.mxu0 0
    %613 = vmatprep.subr.bf16.mxu0 0
    %614 = vmatpush2.bf16.msra.mxu0 0
    %615 = vmatprep.subr.bf16.mxu0 0
    %616 = vmatpush2.bf16.msra.mxu0 0
    %617 = vmatprep.subr.bf16.mxu0 0
    %618 = vmatpush2.bf16.msra.mxu0 0
    %619 = vmatprep.subr.bf16.mxu0 0
    %620 = vmatpush2.bf16.msra.mxu0 0
    %621 = vmatprep.subr.bf16.mxu0 0
    %622 = vmatpush2.bf16.msra.mxu0 0
    %623 = vmatprep.mubr.bf16.mxu0 0
    %624 = vmatmul.mubr.bf16.gmra.mxu0 %v589
    %v625 = vpop.f32.mrf.mxu0
    %v626 = vadd.f32 %v263, %v625
    %v627 = vpop.f32.mrf.mxu0
    %v628 = vpop.f32.mrf.mxu0
    %v629 = vpop.f32.mrf.mxu0
    %630 = vdwg.mxu0
    %v631 = vxor.u32 %v626, 2147483648
    %v632 = vmul.f32 %v631, 1.442695
    %v633 = vpow.pop %v632
    %v634 = vadd.f32 %v633, 1.0
    %v635 = vrcp.pop %v634
    %v636 = vmul.f32 1.0, %v635
    %v637 = vtanh.pop %v626
    %v638 = vmul.f32 %v636, %v499
    %640 = vrot.lane.b32.xlu0 %v637, 64
    %v641 = vpop.permute.xlu0 %640
    %v643 = vmul.f32 %v636, %v641
    %645 = vrot.lane.b32.xlu0 %v643, 32
    %v646 = vpop.permute.xlu0 %645
    %v648 = vadd.f32 %v638, %v646
    %v649 = vtanh.pop %v648
    %651 = vrot.lane.b32.xlu0 %v649, 64
    %v652 = vpop.permute.xlu0 %651
    %v654 = vmul.f32 %v636, %v652
    %v655 = vpack.c.bf16 %v577, %v577
    %657 = vrot.lane.b32.xlu0 %v655, 32
    %v658 = vpop.permute.xlu0 %657
    %v660 = vsel %vm82, %v658, 0
    %662 = vmatprep.subr.bf16.mxu0 0
    %663 = vmatpush1.bf16.msra.mxu0 0
    %664 = vmatprep.subr.bf16.mxu0 0
    %665 = vmatpush1.bf16.msra.mxu0 0
    %666 = vmatprep.subr.bf16.mxu0 0
    %667 = vmatpush1.bf16.msra.mxu0 0
    %668 = vmatprep.subr.bf16.mxu0 0
    %669 = vmatpush1.bf16.msra.mxu0 0
    %670 = vmatprep.subr.bf16.mxu0 0
    %671 = vmatpush1.bf16.msra.mxu0 0
    %672 = vmatprep.subr.bf16.mxu0 0
    %673 = vmatpush1.bf16.msra.mxu0 0
    %674 = vmatprep.subr.bf16.mxu0 0
    %675 = vmatpush1.bf16.msra.mxu0 %v182
    %676 = vmatprep.subr.bf16.mxu0 0
    %677 = vmatpush1.bf16.msra.mxu0 %v181
    %678 = vmatprep.subr.bf16.mxu0 0
    %679 = vmatpush2.bf16.msra.mxu0 0
    %680 = vmatprep.subr.bf16.mxu0 0
    %681 = vmatpush2.bf16.msra.mxu0 0
    %682 = vmatprep.subr.bf16.mxu0 0
    %683 = vmatpush2.bf16.msra.mxu0 0
    %684 = vmatprep.subr.bf16.mxu0 0
    %685 = vmatpush2.bf16.msra.mxu0 0
    %686 = vmatprep.subr.bf16.mxu0 0
    %687 = vmatpush2.bf16.msra.mxu0 0
    %688 = vmatprep.subr.bf16.mxu0 0
    %689 = vmatpush2.bf16.msra.mxu0 0
    %690 = vmatprep.subr.bf16.mxu0 0
    %691 = vmatpush2.bf16.msra.mxu0 0
    %692 = vmatprep.subr.bf16.mxu0 0
    %693 = vmatpush2.bf16.msra.mxu0 0
    %694 = vmatprep.mubr.bf16.mxu0 0
    %695 = vmatmul.mubr.bf16.gmra.mxu0 %v660
    %v696 = vpop.f32.mrf.mxu0
    %v697 = vadd.f32 0.0, %v696
    %v698 = vpop.f32.mrf.mxu0
    %v699 = vpop.f32.mrf.mxu0
    %v700 = vpop.f32.mrf.mxu0
    %701 = vdwg.mxu0
    %v702 = vadd.f32 %v141, %v697
    %v703 = vxor.u32 %v702, 2147483648
    %v704 = vmul.f32 %v703, 1.442695
    %v705 = vpow.pop %v704
    %v706 = vadd.f32 %v705, 1.0
    %v707 = vrcp.pop %v706
    %v708 = vmul.f32 1.0, %v707
    %v709 = vtanh.pop %v702
    %v710 = vmul.f32 %v708, %v571
    %712 = vrot.lane.b32.xlu0 %v709, 64
    %v713 = vpop.permute.xlu0 %712
    %v715 = vmul.f32 %v708, %v713
    %717 = vrot.lane.b32.xlu0 %v715, 32
    %v718 = vpop.permute.xlu0 %717
    %v720 = vadd.f32 %v710, %v718
    %v721 = vtanh.pop %v720
    %723 = vrot.lane.b32.xlu0 %v721, 64
    %v724 = vpop.permute.xlu0 %723
    %v726 = vmul.f32 %v708, %v724
    %728 = vrot.lane.b32.xlu0 %v726, 32
    %v729 = vpop.permute.xlu0 %728
    %732 = vrot.lane.b32.xlu0 %v654, 64
    %v733 = vpop.permute.xlu0 %732
    %v735 = vsel %vm82, %v729, %v733
    %v736 = vpack.c.bf16 %v735, %v735
    %v738 = vsel %vm289, %v736, 0
    %740 = vmatprep.subr.bf16.mxu0 0
    %741 = vmatpush1.bf16.msra.mxu0 0
    %742 = vmatprep.subr.bf16.mxu0 0
    %743 = vmatpush1.bf16.msra.mxu0 0
    %744 = vmatprep.subr.bf16.mxu0 0
    %745 = vmatpush1.bf16.msra.mxu0 0
    %746 = vmatprep.subr.bf16.mxu0 0
    %747 = vmatpush1.bf16.msra.mxu0 0
    %748 = vmatprep.subr.bf16.mxu0 0
    %749 = vmatpush1.bf16.msra.mxu0 %v284
    %750 = vmatprep.subr.bf16.mxu0 0
    %751 = vmatpush1.bf16.msra.mxu0 %v283
    %752 = vmatprep.subr.bf16.mxu0 0
    %753 = vmatpush1.bf16.msra.mxu0 %v282
    %754 = vmatprep.subr.bf16.mxu0 0
    %755 = vmatpush1.bf16.msra.mxu0 %v281
    %756 = vmatprep.subr.bf16.mxu0 0
    %757 = vmatpush2.bf16.msra.mxu0 0
    %758 = vmatprep.subr.bf16.mxu0 0
    %759 = vmatpush2.bf16.msra.mxu0 0
    %760 = vmatprep.subr.bf16.mxu0 0
    %761 = vmatpush2.bf16.msra.mxu0 0
    %762 = vmatprep.subr.bf16.mxu0 0
    %763 = vmatpush2.bf16.msra.mxu0 0
    %764 = vmatprep.subr.bf16.mxu0 0
    %765 = vmatpush2.bf16.msra.mxu0 0
    %766 = vmatprep.subr.bf16.mxu0 0
    %767 = vmatpush2.bf16.msra.mxu0 0
    %768 = vmatprep.subr.bf16.mxu0 0
    %769 = vmatpush2.bf16.msra.mxu0 0
    %770 = vmatprep.subr.bf16.mxu0 0
    %771 = vmatpush2.bf16.msra.mxu0 0
    %772 = vmatprep.mubr.bf16.mxu0 0
    %773 = vmatmul.mubr.bf16.gmra.mxu0 %v738
    %v774 = vpop.f32.mrf.mxu0
    %v775 = vadd.f32 %v263, %v774
    %v776 = vpop.f32.mrf.mxu0
    %v777 = vpop.f32.mrf.mxu0
    %v778 = vpop.f32.mrf.mxu0
    %779 = vdwg.mxu0
    %v780 = vxor.u32 %v775, 2147483648
    %v781 = vmul.f32 %v780, 1.442695
    %v782 = vpow.pop %v781
    %v783 = vadd.f32 %v782, 1.0
    %v784 = vrcp.pop %v783
    %v785 = vmul.f32 1.0, %v784
    %v786 = vtanh.pop %v775
    %v787 = vmul.f32 %v785, %v648
    %789 = vrot.lane.b32.xlu0 %v786, 64
    %v790 = vpop.permute.xlu0 %789
    %v792 = vmul.f32 %v785, %v790
    %794 = vrot.lane.b32.xlu0 %v792, 32
    %v795 = vpop.permute.xlu0 %794
    %v797 = vadd.f32 %v787, %v795
    %v798 = vtanh.pop %v797
    %800 = vrot.lane.b32.xlu0 %v798, 64
    %v801 = vpop.permute.xlu0 %800
    %v803 = vmul.f32 %v785, %v801
    %v804 = vpack.c.bf16 %v726, %v726
    %806 = vrot.lane.b32.xlu0 %v804, 32
    %v807 = vpop.permute.xlu0 %806
    %v809 = vsel %vm82, %v807, 0
    %811 = vmatprep.subr.bf16.mxu0 0
    %812 = vmatpush1.bf16.msra.mxu0 0
    %813 = vmatprep.subr.bf16.mxu0 0
    %814 = vmatpush1.bf16.msra.mxu0 0
    %815 = vmatprep.subr.bf16.mxu0 0
    %816 = vmatpush1.bf16.msra.mxu0 0
    %817 = vmatprep.subr.bf16.mxu0 0
    %818 = vmatpush1.bf16.msra.mxu0 0
    %819 = vmatprep.subr.bf16.mxu0 0
    %820 = vmatpush1.bf16.msra.mxu0 0
    %821 = vmatprep.subr.bf16.mxu0 0
    %822 = vmatpush1.bf16.msra.mxu0 0
    %823 = vmatprep.subr.bf16.mxu0 0
    %824 = vmatpush1.bf16.msra.mxu0 %v182
    %825 = vmatprep.subr.bf16.mxu0 0
    %826 = vmatpush1.bf16.msra.mxu0 %v181
    %827 = vmatprep.subr.bf16.mxu0 0
    %828 = vmatpush2.bf16.msra.mxu0 0
    %829 = vmatprep.subr.bf16.mxu0 0
    %830 = vmatpush2.bf16.msra.mxu0 0
    %831 = vmatprep.subr.bf16.mxu0 0
    %832 = vmatpush2.bf16.msra.mxu0 0
    %833 = vmatprep.subr.bf16.mxu0 0
    %834 = vmatpush2.bf16.msra.mxu0 0
    %835 = vmatprep.subr.bf16.mxu0 0
    %836 = vmatpush2.bf16.msra.mxu0 0
    %837 = vmatprep.subr.bf16.mxu0 0
    %838 = vmatpush2.bf16.msra.mxu0 0
    %839 = vmatprep.subr.bf16.mxu0 0
    %840 = vmatpush2.bf16.msra.mxu0 0
    %841 = vmatprep.subr.bf16.mxu0 0
    %842 = vmatpush2.bf16.msra.mxu0 0
    %843 = vmatprep.mubr.bf16.mxu0 0
    %844 = vmatmul.mubr.bf16.gmra.mxu0 %v809
    %v845 = vpop.f32.mrf.mxu0
    %v846 = vadd.f32 0.0, %v845
    %v847 = vpop.f32.mrf.mxu0
    %v848 = vpop.f32.mrf.mxu0
    %v849 = vpop.f32.mrf.mxu0
    %850 = vdwg.mxu0
    %v851 = vadd.f32 %v146, %v846
    %v852 = vxor.u32 %v851, 2147483648
    %v853 = vmul.f32 %v852, 1.442695
    %v854 = vpow.pop %v853
    %v855 = vadd.f32 %v854, 1.0
    %v856 = vrcp.pop %v855
    %v857 = vmul.f32 1.0, %v856
    %v858 = vtanh.pop %v851
    %v859 = vmul.f32 %v857, %v720
    %861 = vrot.lane.b32.xlu0 %v858, 64
    %v862 = vpop.permute.xlu0 %861
    %v864 = vmul.f32 %v857, %v862
    %866 = vrot.lane.b32.xlu0 %v864, 32
    %v867 = vpop.permute.xlu0 %866
    %v869 = vadd.f32 %v859, %v867
    %v870 = vtanh.pop %v869
    %872 = vrot.lane.b32.xlu0 %v870, 64
    %v873 = vpop.permute.xlu0 %872
    %v875 = vmul.f32 %v857, %v873
    %877 = vrot.lane.b32.xlu0 %v875, 32
    %v878 = vpop.permute.xlu0 %877
    %881 = vrot.lane.b32.xlu0 %v803, 64
    %v882 = vpop.permute.xlu0 %881
    %v884 = vsel %vm82, %v878, %v882
    %v885 = vpack.c.bf16 %v884, %v884
    %v887 = vsel %vm289, %v885, 0
    %889 = vmatprep.subr.bf16.mxu0 0
    %890 = vmatpush1.bf16.msra.mxu0 0
    %891 = vmatprep.subr.bf16.mxu0 0
    %892 = vmatpush1.bf16.msra.mxu0 0
    %893 = vmatprep.subr.bf16.mxu0 0
    %894 = vmatpush1.bf16.msra.mxu0 0
    %895 = vmatprep.subr.bf16.mxu0 0
    %896 = vmatpush1.bf16.msra.mxu0 0
    %897 = vmatprep.subr.bf16.mxu0 0
    %898 = vmatpush1.bf16.msra.mxu0 %v284
    %899 = vmatprep.subr.bf16.mxu0 0
    %900 = vmatpush1.bf16.msra.mxu0 %v283
    %901 = vmatprep.subr.bf16.mxu0 0
    %902 = vmatpush1.bf16.msra.mxu0 %v282
    %903 = vmatprep.subr.bf16.mxu0 0
    %904 = vmatpush1.bf16.msra.mxu0 %v281
    %905 = vmatprep.subr.bf16.mxu0 0
    %906 = vmatpush2.bf16.msra.mxu0 0
    %907 = vmatprep.subr.bf16.mxu0 0
    %908 = vmatpush2.bf16.msra.mxu0 0
    %909 = vmatprep.subr.bf16.mxu0 0
    %910 = vmatpush2.bf16.msra.mxu0 0
    %911 = vmatprep.subr.bf16.mxu0 0
    %912 = vmatpush2.bf16.msra.mxu0 0
    %913 = vmatprep.subr.bf16.mxu0 0
    %914 = vmatpush2.bf16.msra.mxu0 0
    %915 = vmatprep.subr.bf16.mxu0 0
    %916 = vmatpush2.bf16.msra.mxu0 0
    %917 = vmatprep.subr.bf16.mxu0 0
    %918 = vmatpush2.bf16.msra.mxu0 0
    %919 = vmatprep.subr.bf16.mxu0 0
    %920 = vmatpush2.bf16.msra.mxu0 0
    %921 = vmatprep.mubr.bf16.mxu0 0
    %922 = vmatmul.mubr.bf16.gmra.mxu0 %v887
    %v923 = vpop.f32.mrf.mxu0
    %v924 = vadd.f32 %v263, %v923
    %v925 = vpop.f32.mrf.mxu0
    %v926 = vpop.f32.mrf.mxu0
    %v927 = vpop.f32.mrf.mxu0
    %928 = vdwg.mxu0
    %v929 = vxor.u32 %v924, 2147483648
    %v930 = vmul.f32 %v929, 1.442695
    %v931 = vpow.pop %v930
    %v932 = vadd.f32 %v931, 1.0
    %v933 = vrcp.pop %v932
    %v934 = vmul.f32 1.0, %v933
    %v935 = vtanh.pop %v924
    %v936 = vmul.f32 %v934, %v797
    %938 = vrot.lane.b32.xlu0 %v935, 64
    %v939 = vpop.permute.xlu0 %938
    %v941 = vmul.f32 %v934, %v939
    %943 = vrot.lane.b32.xlu0 %v941, 32
    %v944 = vpop.permute.xlu0 %943
    %v946 = vadd.f32 %v936, %v944
    %v947 = vtanh.pop %v946
    %949 = vrot.lane.b32.xlu0 %v947, 64
    %v950 = vpop.permute.xlu0 %949
    %v952 = vmul.f32 %v934, %v950
    %v953 = vpack.c.bf16 %v875, %v875
    %955 = vrot.lane.b32.xlu0 %v953, 32
    %v956 = vpop.permute.xlu0 %955
    %v958 = vsel %vm82, %v956, 0
    %960 = vmatprep.subr.bf16.mxu0 0
    %961 = vmatpush1.bf16.msra.mxu0 0
    %962 = vmatprep.subr.bf16.mxu0 0
    %963 = vmatpush1.bf16.msra.mxu0 0
    %964 = vmatprep.subr.bf16.mxu0 0
    %965 = vmatpush1.bf16.msra.mxu0 0
    %966 = vmatprep.subr.bf16.mxu0 0
    %967 = vmatpush1.bf16.msra.mxu0 0
    %968 = vmatprep.subr.bf16.mxu0 0
    %969 = vmatpush1.bf16.msra.mxu0 0
    %970 = vmatprep.subr.bf16.mxu0 0
    %971 = vmatpush1.bf16.msra.mxu0 0
    %972 = vmatprep.subr.bf16.mxu0 0
    %973 = vmatpush1.bf16.msra.mxu0 %v182
    %974 = vmatprep.subr.bf16.mxu0 0
    %975 = vmatpush1.bf16.msra.mxu0 %v181
    %976 = vmatprep.subr.bf16.mxu0 0
    %977 = vmatpush2.bf16.msra.mxu0 0
    %978 = vmatprep.subr.bf16.mxu0 0
    %979 = vmatpush2.bf16.msra.mxu0 0
    %980 = vmatprep.subr.bf16.mxu0 0
    %981 = vmatpush2.bf16.msra.mxu0 0
    %982 = vmatprep.subr.bf16.mxu0 0
    %983 = vmatpush2.bf16.msra.mxu0 0
    %984 = vmatprep.subr.bf16.mxu0 0
    %985 = vmatpush2.bf16.msra.mxu0 0
    %986 = vmatprep.subr.bf16.mxu0 0
    %987 = vmatpush2.bf16.msra.mxu0 0
    %988 = vmatprep.subr.bf16.mxu0 0
    %989 = vmatpush2.bf16.msra.mxu0 0
    %990 = vmatprep.subr.bf16.mxu0 0
    %991 = vmatpush2.bf16.msra.mxu0 0
    %992 = vmatprep.mubr.bf16.mxu0 0
    %993 = vmatmul.mubr.bf16.gmra.mxu0 %v958
    %v994 = vpop.f32.mrf.mxu0
    %v995 = vadd.f32 0.0, %v994
    %v996 = vpop.f32.mrf.mxu0
    %v997 = vpop.f32.mrf.mxu0
    %v998 = vpop.f32.mrf.mxu0
    %999 = vdwg.mxu0
    %v1000 = vadd.f32 %v149, %v995
    %v1001 = vxor.u32 %v1000, 2147483648
    %v1002 = vmul.f32 %v1001, 1.442695
    %v1003 = vpow.pop %v1002
    %v1004 = vadd.f32 %v1003, 1.0
    %v1005 = vrcp.pop %v1004
    %v1006 = vmul.f32 1.0, %v1005
    %v1007 = vtanh.pop %v1000
    %v1008 = vmul.f32 %v1006, %v869
    %1010 = vrot.lane.b32.xlu0 %v1007, 64
    %v1011 = vpop.permute.xlu0 %1010
    %v1013 = vmul.f32 %v1006, %v1011
    %1015 = vrot.lane.b32.xlu0 %v1013, 32
    %v1016 = vpop.permute.xlu0 %1015
    %v1018 = vadd.f32 %v1008, %v1016
    %v1019 = vtanh.pop %v1018
    %1021 = vrot.lane.b32.xlu0 %v1019, 64
    %v1022 = vpop.permute.xlu0 %1021
    %v1024 = vmul.f32 %v1006, %v1022
    %1026 = vrot.lane.b32.xlu0 %v1024, 32
    %v1027 = vpop.permute.xlu0 %1026
    %1030 = vrot.lane.b32.xlu0 %v952, 64
    %v1031 = vpop.permute.xlu0 %1030
    %v1033 = vsel %vm82, %v1027, %v1031
    %v1034 = vpack.c.bf16 %v1033, %v1033
    %v1036 = vsel %vm289, %v1034, 0
    %1038 = vmatprep.subr.bf16.mxu0 0
    %1039 = vmatpush1.bf16.msra.mxu0 0
    %1040 = vmatprep.subr.bf16.mxu0 0
    %1041 = vmatpush1.bf16.msra.mxu0 0
    %1042 = vmatprep.subr.bf16.mxu0 0
    %1043 = vmatpush1.bf16.msra.mxu0 0
    %1044 = vmatprep.subr.bf16.mxu0 0
    %1045 = vmatpush1.bf16.msra.mxu0 0
    %1046 = vmatprep.subr.bf16.mxu0 0
    %1047 = vmatpush1.bf16.msra.mxu0 %v284
    %1048 = vmatprep.subr.bf16.mxu0 0
    %1049 = vmatpush1.bf16.msra.mxu0 %v283
    %1050 = vmatprep.subr.bf16.mxu0 0
    %1051 = vmatpush1.bf16.msra.mxu0 %v282
    %1052 = vmatprep.subr.bf16.mxu0 0
    %1053 = vmatpush1.bf16.msra.mxu0 %v281
    %1054 = vmatprep.subr.bf16.mxu0 0
    %1055 = vmatpush2.bf16.msra.mxu0 0
    %1056 = vmatprep.subr.bf16.mxu0 0
    %1057 = vmatpush2.bf16.msra.mxu0 0
    %1058 = vmatprep.subr.bf16.mxu0 0
    %1059 = vmatpush2.bf16.msra.mxu0 0
    %1060 = vmatprep.subr.bf16.mxu0 0
    %1061 = vmatpush2.bf16.msra.mxu0 0
    %1062 = vmatprep.subr.bf16.mxu0 0
    %1063 = vmatpush2.bf16.msra.mxu0 0
    %1064 = vmatprep.subr.bf16.mxu0 0
    %1065 = vmatpush2.bf16.msra.mxu0 0
    %1066 = vmatprep.subr.bf16.mxu0 0
    %1067 = vmatpush2.bf16.msra.mxu0 0
    %1068 = vmatprep.subr.bf16.mxu0 0
    %1069 = vmatpush2.bf16.msra.mxu0 0
    %1070 = vmatprep.mubr.bf16.mxu0 0
    %1071 = vmatmul.mubr.bf16.gmra.mxu0 %v1036
    %v1072 = vpop.f32.mrf.mxu0
    %v1073 = vadd.f32 %v263, %v1072
    %v1074 = vpop.f32.mrf.mxu0
    %v1075 = vpop.f32.mrf.mxu0
    %v1076 = vpop.f32.mrf.mxu0
    %1077 = vdwg.mxu0
    %v1078 = vxor.u32 %v1073, 2147483648
    %v1079 = vmul.f32 %v1078, 1.442695
    %v1080 = vpow.pop %v1079
    %v1081 = vadd.f32 %v1080, 1.0
    %v1082 = vrcp.pop %v1081
    %v1083 = vmul.f32 1.0, %v1082
    %v1084 = vtanh.pop %v1073
    %v1085 = vmul.f32 %v1083, %v946
    %1087 = vrot.lane.b32.xlu0 %v1084, 64
    %v1088 = vpop.permute.xlu0 %1087
    %v1090 = vmul.f32 %v1083, %v1088
    %1092 = vrot.lane.b32.xlu0 %v1090, 32
    %v1093 = vpop.permute.xlu0 %1092
    %v1095 = vadd.f32 %v1085, %v1093
    %v1096 = vtanh.pop %v1095
    %1098 = vrot.lane.b32.xlu0 %v1096, 64
    %v1099 = vpop.permute.xlu0 %1098
    %v1101 = vmul.f32 %v1083, %v1099
    %v1102 = vpack.c.bf16 %v1024, %v1024
    %1104 = vrot.lane.b32.xlu0 %v1102, 32
    %v1105 = vpop.permute.xlu0 %1104
    %v1107 = vsel %vm82, %v1105, 0
    %1109 = vmatprep.subr.bf16.mxu0 0
    %1110 = vmatpush1.bf16.msra.mxu0 0
    %1111 = vmatprep.subr.bf16.mxu0 0
    %1112 = vmatpush1.bf16.msra.mxu0 0
    %1113 = vmatprep.subr.bf16.mxu0 0
    %1114 = vmatpush1.bf16.msra.mxu0 0
    %1115 = vmatprep.subr.bf16.mxu0 0
    %1116 = vmatpush1.bf16.msra.mxu0 0
    %1117 = vmatprep.subr.bf16.mxu0 0
    %1118 = vmatpush1.bf16.msra.mxu0 0
    %1119 = vmatprep.subr.bf16.mxu0 0
    %1120 = vmatpush1.bf16.msra.mxu0 0
    %1121 = vmatprep.subr.bf16.mxu0 0
    %1122 = vmatpush1.bf16.msra.mxu0 %v182
    %1123 = vmatprep.subr.bf16.mxu0 0
    %1124 = vmatpush1.bf16.msra.mxu0 %v181
    %1125 = vmatprep.subr.bf16.mxu0 0
    %1126 = vmatpush2.bf16.msra.mxu0 0
    %1127 = vmatprep.subr.bf16.mxu0 0
    %1128 = vmatpush2.bf16.msra.mxu0 0
    %1129 = vmatprep.subr.bf16.mxu0 0
    %1130 = vmatpush2.bf16.msra.mxu0 0
    %1131 = vmatprep.subr.bf16.mxu0 0
    %1132 = vmatpush2.bf16.msra.mxu0 0
    %1133 = vmatprep.subr.bf16.mxu0 0
    %1134 = vmatpush2.bf16.msra.mxu0 0
    %1135 = vmatprep.subr.bf16.mxu0 0
    %1136 = vmatpush2.bf16.msra.mxu0 0
    %1137 = vmatprep.subr.bf16.mxu0 0
    %1138 = vmatpush2.bf16.msra.mxu0 0
    %1139 = vmatprep.subr.bf16.mxu0 0
    %1140 = vmatpush2.bf16.msra.mxu0 0
    %1141 = vmatprep.mubr.bf16.mxu0 0
    %1142 = vmatmul.mubr.bf16.gmra.mxu0 %v1107
    %v1143 = vpop.f32.mrf.mxu0
    %v1144 = vadd.f32 0.0, %v1143
    %v1145 = vpop.f32.mrf.mxu0
    %v1146 = vpop.f32.mrf.mxu0
    %v1147 = vpop.f32.mrf.mxu0
    %1148 = vdwg.mxu0
    %v1149 = vadd.f32 %v154, %v1144
    %v1150 = vxor.u32 %v1149, 2147483648
    %v1151 = vmul.f32 %v1150, 1.442695
    %v1152 = vpow.pop %v1151
    %v1153 = vadd.f32 %v1152, 1.0
    %v1154 = vrcp.pop %v1153
    %v1155 = vmul.f32 1.0, %v1154
    %v1156 = vtanh.pop %v1149
    %v1157 = vmul.f32 %v1155, %v1018
    %1159 = vrot.lane.b32.xlu0 %v1156, 64
    %v1160 = vpop.permute.xlu0 %1159
    %v1162 = vmul.f32 %v1155, %v1160
    %1164 = vrot.lane.b32.xlu0 %v1162, 32
    %v1165 = vpop.permute.xlu0 %1164
    %v1167 = vadd.f32 %v1157, %v1165
    %v1168 = vtanh.pop %v1167
    %1170 = vrot.lane.b32.xlu0 %v1168, 64
    %v1171 = vpop.permute.xlu0 %1170
    %v1173 = vmul.f32 %v1155, %v1171
    %1175 = vrot.lane.b32.xlu0 %v1173, 32
    %v1176 = vpop.permute.xlu0 %1175
    %1179 = vrot.lane.b32.xlu0 %v1101, 64
    %v1180 = vpop.permute.xlu0 %1179
    %v1182 = vsel %vm82, %v1176, %v1180
    %v1183 = vpack.c.bf16 %v1182, %v1182
    %v1185 = vsel %vm289, %v1183, 0
    %1187 = vmatprep.subr.bf16.mxu0 0
    %1188 = vmatpush1.bf16.msra.mxu0 0
    %1189 = vmatprep.subr.bf16.mxu0 0
    %1190 = vmatpush1.bf16.msra.mxu0 0
    %1191 = vmatprep.subr.bf16.mxu0 0
    %1192 = vmatpush1.bf16.msra.mxu0 0
    %1193 = vmatprep.subr.bf16.mxu0 0
    %1194 = vmatpush1.bf16.msra.mxu0 0
    %1195 = vmatprep.subr.bf16.mxu0 0
    %1196 = vmatpush1.bf16.msra.mxu0 %v284
    %1197 = vmatprep.subr.bf16.mxu0 0
    %1198 = vmatpush1.bf16.msra.mxu0 %v283
    %1199 = vmatprep.subr.bf16.mxu0 0
    %1200 = vmatpush1.bf16.msra.mxu0 %v282
    %1201 = vmatprep.subr.bf16.mxu0 0
    %1202 = vmatpush1.bf16.msra.mxu0 %v281
    %1203 = vmatprep.subr.bf16.mxu0 0
    %1204 = vmatpush2.bf16.msra.mxu0 0
    %1205 = vmatprep.subr.bf16.mxu0 0
    %1206 = vmatpush2.bf16.msra.mxu0 0
    %1207 = vmatprep.subr.bf16.mxu0 0
    %1208 = vmatpush2.bf16.msra.mxu0 0
    %1209 = vmatprep.subr.bf16.mxu0 0
    %1210 = vmatpush2.bf16.msra.mxu0 0
    %1211 = vmatprep.subr.bf16.mxu0 0
    %1212 = vmatpush2.bf16.msra.mxu0 0
    %1213 = vmatprep.subr.bf16.mxu0 0
    %1214 = vmatpush2.bf16.msra.mxu0 0
    %1215 = vmatprep.subr.bf16.mxu0 0
    %1216 = vmatpush2.bf16.msra.mxu0 0
    %1217 = vmatprep.subr.bf16.mxu0 0
    %1218 = vmatpush2.bf16.msra.mxu0 0
    %1219 = vmatprep.mubr.bf16.mxu0 0
    %1220 = vmatmul.mubr.bf16.gmra.mxu0 %v1185
    %v1221 = vpop.f32.mrf.mxu0
    %v1222 = vadd.f32 %v263, %v1221
    %v1223 = vpop.f32.mrf.mxu0
    %v1224 = vpop.f32.mrf.mxu0
    %v1225 = vpop.f32.mrf.mxu0
    %1226 = vdwg.mxu0
    %v1227 = vxor.u32 %v1222, 2147483648
    %v1228 = vmul.f32 %v1227, 1.442695
    %v1229 = vpow.pop %v1228
    %v1230 = vadd.f32 %v1229, 1.0
    %v1231 = vrcp.pop %v1230
    %v1232 = vmul.f32 1.0, %v1231
    %v1233 = vtanh.pop %v1222
    %v1234 = vmul.f32 %v1232, %v1095
    %1236 = vrot.lane.b32.xlu0 %v1233, 64
    %v1237 = vpop.permute.xlu0 %1236
    %v1239 = vmul.f32 %v1232, %v1237
    %1241 = vrot.lane.b32.xlu0 %v1239, 32
    %v1242 = vpop.permute.xlu0 %1241
    %v1244 = vadd.f32 %v1234, %v1242
    %v1245 = vtanh.pop %v1244
    %1247 = vrot.lane.b32.xlu0 %v1245, 64
    %v1248 = vpop.permute.xlu0 %1247
    %v1250 = vmul.f32 %v1232, %v1248
    %v1251 = vpack.c.bf16 %v1173, %v1173
    %1253 = vrot.lane.b32.xlu0 %v1251, 32
    %v1254 = vpop.permute.xlu0 %1253
    %v1256 = vsel %vm82, %v1254, 0
    %1258 = vmatprep.subr.bf16.mxu0 0
    %1259 = vmatpush1.bf16.msra.mxu0 0
    %1260 = vmatprep.subr.bf16.mxu0 0
    %1261 = vmatpush1.bf16.msra.mxu0 0
    %1262 = vmatprep.subr.bf16.mxu0 0
    %1263 = vmatpush1.bf16.msra.mxu0 0
    %1264 = vmatprep.subr.bf16.mxu0 0
    %1265 = vmatpush1.bf16.msra.mxu0 0
    %1266 = vmatprep.subr.bf16.mxu0 0
    %1267 = vmatpush1.bf16.msra.mxu0 0
    %1268 = vmatprep.subr.bf16.mxu0 0
    %1269 = vmatpush1.bf16.msra.mxu0 0
    %1270 = vmatprep.subr.bf16.mxu0 0
    %1271 = vmatpush1.bf16.msra.mxu0 %v182
    %1272 = vmatprep.subr.bf16.mxu0 0
    %1273 = vmatpush1.bf16.msra.mxu0 %v181
    %1274 = vmatprep.subr.bf16.mxu0 0
    %1275 = vmatpush2.bf16.msra.mxu0 0
    %1276 = vmatprep.subr.bf16.mxu0 0
    %1277 = vmatpush2.bf16.msra.mxu0 0
    %1278 = vmatprep.subr.bf16.mxu0 0
    %1279 = vmatpush2.bf16.msra.mxu0 0
    %1280 = vmatprep.subr.bf16.mxu0 0
    %1281 = vmatpush2.bf16.msra.mxu0 0
    %1282 = vmatprep.subr.bf16.mxu0 0
    %1283 = vmatpush2.bf16.msra.mxu0 0
    %1284 = vmatprep.subr.bf16.mxu0 0
    %1285 = vmatpush2.bf16.msra.mxu0 0
    %1286 = vmatprep.subr.bf16.mxu0 0
    %1287 = vmatpush2.bf16.msra.mxu0 0
    %1288 = vmatprep.subr.bf16.mxu0 0
    %1289 = vmatpush2.bf16.msra.mxu0 0
    %1290 = vmatprep.mubr.bf16.mxu0 0
    %1291 = vmatmul.mubr.bf16.gmra.mxu0 %v1256
    %v1292 = vpop.f32.mrf.mxu0
    %v1293 = vadd.f32 0.0, %v1292
    %v1294 = vpop.f32.mrf.mxu0
    %v1295 = vpop.f32.mrf.mxu0
    %v1296 = vpop.f32.mrf.mxu0
    %1297 = vdwg.mxu0
    %v1298 = vadd.f32 %v157, %v1293
    %v1299 = vxor.u32 %v1298, 2147483648
    %v1300 = vmul.f32 %v1299, 1.442695
    %v1301 = vpow.pop %v1300
    %v1302 = vadd.f32 %v1301, 1.0
    %v1303 = vrcp.pop %v1302
    %v1304 = vmul.f32 1.0, %v1303
    %v1305 = vtanh.pop %v1298
    %v1306 = vmul.f32 %v1304, %v1167
    %1308 = vrot.lane.b32.xlu0 %v1305, 64
    %v1309 = vpop.permute.xlu0 %1308
    %v1311 = vmul.f32 %v1304, %v1309
    %1313 = vrot.lane.b32.xlu0 %v1311, 32
    %v1314 = vpop.permute.xlu0 %1313
    %v1316 = vadd.f32 %v1306, %v1314
    %v1317 = vtanh.pop %v1316
    %1319 = vrot.lane.b32.xlu0 %v1317, 64
    %v1320 = vpop.permute.xlu0 %1319
    %v1322 = vmul.f32 %v1304, %v1320
    %1324 = vrot.lane.b32.xlu0 %v1322, 32
    %v1325 = vpop.permute.xlu0 %1324
    %1328 = vrot.lane.b32.xlu0 %v1250, 64
    %v1329 = vpop.permute.xlu0 %1328
    %v1331 = vsel %vm82, %v1325, %v1329
    %v1332 = vpack.c.bf16 %v1331, %v1331
    %v1334 = vsel %vm289, %v1332, 0
    %1336 = vmatprep.subr.bf16.mxu0 0
    %1337 = vmatpush1.bf16.msra.mxu0 0
    %1338 = vmatprep.subr.bf16.mxu0 0
    %1339 = vmatpush1.bf16.msra.mxu0 0
    %1340 = vmatprep.subr.bf16.mxu0 0
    %1341 = vmatpush1.bf16.msra.mxu0 0
    %1342 = vmatprep.subr.bf16.mxu0 0
    %1343 = vmatpush1.bf16.msra.mxu0 0
    %1344 = vmatprep.subr.bf16.mxu0 0
    %1345 = vmatpush1.bf16.msra.mxu0 %v284
    %1346 = vmatprep.subr.bf16.mxu0 0
    %1347 = vmatpush1.bf16.msra.mxu0 %v283
    %1348 = vmatprep.subr.bf16.mxu0 0
    %1349 = vmatpush1.bf16.msra.mxu0 %v282
    %1350 = vmatprep.subr.bf16.mxu0 0
    %1351 = vmatpush1.bf16.msra.mxu0 %v281
    %1352 = vmatprep.subr.bf16.mxu0 0
    %1353 = vmatpush2.bf16.msra.mxu0 0
    %1354 = vmatprep.subr.bf16.mxu0 0
    %1355 = vmatpush2.bf16.msra.mxu0 0
    %1356 = vmatprep.subr.bf16.mxu0 0
    %1357 = vmatpush2.bf16.msra.mxu0 0
    %1358 = vmatprep.subr.bf16.mxu0 0
    %1359 = vmatpush2.bf16.msra.mxu0 0
    %1360 = vmatprep.subr.bf16.mxu0 0
    %1361 = vmatpush2.bf16.msra.mxu0 0
    %1362 = vmatprep.subr.bf16.mxu0 0
    %1363 = vmatpush2.bf16.msra.mxu0 0
    %1364 = vmatprep.subr.bf16.mxu0 0
    %1365 = vmatpush2.bf16.msra.mxu0 0
    %1366 = vmatprep.subr.bf16.mxu0 0
    %1367 = vmatpush2.bf16.msra.mxu0 0
    %1368 = vmatprep.mubr.bf16.mxu0 0
    %1369 = vmatmul.mubr.bf16.gmra.mxu0 %v1334
    %v1370 = vpop.f32.mrf.mxu0
    %v1371 = vadd.f32 %v263, %v1370
    %v1372 = vpop.f32.mrf.mxu0
    %v1373 = vpop.f32.mrf.mxu0
    %v1374 = vpop.f32.mrf.mxu0
    %1375 = vdwg.mxu0
    %v1376 = vxor.u32 %v1371, 2147483648
    %v1377 = vmul.f32 %v1376, 1.442695
    %v1378 = vpow.pop %v1377
    %v1379 = vadd.f32 %v1378, 1.0
    %v1380 = vrcp.pop %v1379
    %v1381 = vmul.f32 1.0, %v1380
    %v1382 = vtanh.pop %v1371
    %v1383 = vmul.f32 %v1381, %v1244
    %1385 = vrot.lane.b32.xlu0 %v1382, 64
    %v1386 = vpop.permute.xlu0 %1385
    %v1388 = vmul.f32 %v1381, %v1386
    %1390 = vrot.lane.b32.xlu0 %v1388, 32
    %v1391 = vpop.permute.xlu0 %1390
    %v1393 = vadd.f32 %v1383, %v1391
    %v1394 = vtanh.pop %v1393
    %1396 = vrot.lane.b32.xlu0 %v1394, 64
    %v1397 = vpop.permute.xlu0 %1396
    %v1399 = vmul.f32 %v1381, %v1397
    %v1400 = vpack.c.bf16 %v1399, %v1399
    %v1401 = vld [vmem:[%s6] sm:$0xf]
    %v1402 = vld [vmem:[%s6 + $0x4] sm:$0xf]
    %v1403 = vld [vmem:[%s6 + $0x8] sm:$0xf]
    %v1404 = vld [vmem:[%s6 + $0xc] sm:$0xf]
    %v1405 = vld [vmem:[%s7] sm:$0x1]
    %v1407 = vlaneseq
    %v1408 = vshrl.u32 %v1407, 7
    %v1409 = vsub.s32 0, %v1408
    %v1410 = vrot.slane %v1405, %v1409
    %1413 = vrot.lane.b32.xlu0 %v1400, 32
    %v1414 = vpop.permute.xlu0 %1413
    %v1419 = vunpack.c.l.b16 %v1401
    %v1420 = vunpack.c.l.b16 %v1402
    %v1421 = vunpack.c.l.b16 %v1403
    %v1422 = vunpack.c.l.b16 %v1404
    %v1423 = vpack.c.b16 %v1420, %v1419
    %v1424 = vpack.c.b16 %v1422, %v1421
    %v1428 = vsel %vm82, %v1414, 0
    %1430 = vmatprep.subr.bf16.mxu0 0
    %1431 = vmatpush1.bf16.msra.mxu0 0
    %1432 = vmatprep.subr.bf16.mxu0 0
    %1433 = vmatpush1.bf16.msra.mxu0 0
    %1434 = vmatprep.subr.bf16.mxu0 0
    %1435 = vmatpush1.bf16.msra.mxu0 0
    %1436 = vmatprep.subr.bf16.mxu0 0
    %1437 = vmatpush1.bf16.msra.mxu0 0
    %1438 = vmatprep.subr.bf16.mxu0 0
    %1439 = vmatpush1.bf16.msra.mxu0 0
    %1440 = vmatprep.subr.bf16.mxu0 0
    %1441 = vmatpush1.bf16.msra.mxu0 0
    %1442 = vmatprep.subr.bf16.mxu0 0
    %1443 = vmatpush1.bf16.msra.mxu0 %v1424
    %1444 = vmatprep.subr.bf16.mxu0 0
    %1445 = vmatpush1.bf16.msra.mxu0 %v1423
    %1446 = vmatprep.subr.bf16.mxu0 0
    %1447 = vmatpush2.bf16.msra.mxu0 0
    %1448 = vmatprep.subr.bf16.mxu0 0
    %1449 = vmatpush2.bf16.msra.mxu0 0
    %1450 = vmatprep.subr.bf16.mxu0 0
    %1451 = vmatpush2.bf16.msra.mxu0 0
    %1452 = vmatprep.subr.bf16.mxu0 0
    %1453 = vmatpush2.bf16.msra.mxu0 0
    %1454 = vmatprep.subr.bf16.mxu0 0
    %1455 = vmatpush2.bf16.msra.mxu0 0
    %1456 = vmatprep.subr.bf16.mxu0 0
    %1457 = vmatpush2.bf16.msra.mxu0 0
    %1458 = vmatprep.subr.bf16.mxu0 0
    %1459 = vmatpush2.bf16.msra.mxu0 0
    %1460 = vmatprep.subr.bf16.mxu0 0
    %1461 = vmatpush2.bf16.msra.mxu0 0
    %1462 = vmatprep.mubr.bf16.mxu0 0
    %1463 = vmatmul.mubr.bf16.gmra.mxu0 %v1428
    %v1464 = vpop.f32.mrf.mxu0
    %v1465 = vadd.f32 %v1410, %v1464
    %v1466 = vpop.f32.mrf.mxu0
    %v1467 = vpop.f32.mrf.mxu0
    %v1468 = vpop.f32.mrf.mxu0
    %1469 = vdwg.mxu0
    %v1470 = vmax.f32 %v1465, 0.0
    %v1471 = vmul.f32 %v1470, %v1470
    %v1472 = vsel %vm82, %v1471, 0.0
    %1473 = vadd.xlane.f32.xlu0 %v1472
    %v1474 = vpop.xlane.xlu0 %1473
    %v1475 = vrsqrt.pop %v1474
    %v1476 = vmul.f32 %v1474, %v1475
    %vm1477 = vcmp.eq.f32.partialorder %v1474, inf
    %v1478 = vsel %vm1477, %v1474, %v1476
    %vm1479 = vcmp.eq.f32.partialorder %v1474, 0.0
    %v1480 = vand.u32 %v1474, 2147483648
    %v1481 = vsel %vm1479, %v1480, %v1478
    %v1482 = vadd.f32 %v1481, 1e-05
    %v1483 = vrcp.pop %v1482
    %v1484 = vmul.f32 %v1470, %v1483
    %1485 = vst.msk [vmem:[#allocation2] sm:$0xff] %vm82, %v1484
    // Predicated region
    $region34: #{_forward_impl.1} parent=1 // pred_check
      _
    $region35: #{_forward_impl.1} parent=1 // pred_check_branch
      %1487 = sbr.rel (0) target = $region37
    $region36: #{_forward_impl.1} parent=1 // pred_region
      %s1489 = ssub.s32 128, 128
      %1490 = vsyncadd [#allocation3], %s1489
      %s1492 = sshll.u32 [#allocation2], 4
      %s1493 = int_to_ptr.vmem [resolvable:$true] %s1492
      %1495 = dma.vmem_to_hbm [thread:$0]  %s1493, 128, %s8, [#allocation3]
    $region37: #{_forward_impl.1} parent=1 // pred_fallthru
      _
    // Predicated region
    $region38: #{_forward_impl.1} parent=1 // pred_check
      _
    $region39: #{_forward_impl.1} parent=1 // pred_check_branch
      %1497 = sbr.rel (0) target = $region41
    $region40: #{_forward_impl.1} parent=1 // pred_region
      %1498 = dma.done [#allocation3], 128
    $region41: #{_forward_impl.1} parent=1 // pred_fallthru
      _
    %1499 = vsyncpa [#allocation3], 1

</llo_original>
